<compile_context>
chip_gen: v6e
topology: v6e:2x2x1
jax: 0.10.0
libtpu: 0.0.40
codegen_flags: <defaults>
</compile_context>

<pallas_src>
import numpy as np
import jax
import jax.numpy as jnp
from jax.experimental import pallas as pl
from jax.experimental.pallas import tpu as pltpu


# ---------------------------------------------------------------------------
# Operator matrices (host-side glue, all tiny)
# ---------------------------------------------------------------------------
def adaptive_avg_pool_matrix(in_size: int, out_size: int) -> np.ndarray:
    """A[out, in]: rows average PyTorch AdaptiveAvgPool bins."""
    A = np.zeros((out_size, in_size), dtype=np.float32)
    for i in range(out_size):
        start = (i * in_size) // out_size
        end = -((-(i + 1) * in_size) // out_size)  # ceil((i+1)*in/out)
        A[i, start:end] = 1.0 / (end - start)
    return A


def bilinear_upsample_matrix(out_size: int, in_size: int) -> np.ndarray:
    """U[out, in]: bilinear interpolation weights, align_corners=False."""
    U = np.zeros((out_size, in_size), dtype=np.float32)
    scale = in_size / out_size
    for i in range(out_size):
        src = max((i + 0.5) * scale - 0.5, 0.0)
        j0 = min(int(np.floor(src)), in_size - 1)
        j1 = min(j0 + 1, in_size - 1)
        w1 = src - j0
        U[i, j0] += 1.0 - w1
        U[i, j1] += w1
    return U


# ---------------------------------------------------------------------------
# Kernel 1: pooled features + fused (stage conv @ bottleneck chunk)
# ---------------------------------------------------------------------------
def _make_pool_kernel(num_stages, offs, cnts, kp):
    def pool_kernel(x_ref, a2t_ref, wft_ref, f_ref, acc_ref):
        # x_ref  : (1, C, TR)     channel-major features, spatial on lanes
        # a2t_ref: (TR, KP)       pooling columns (A2^T) for this tile
        # wft_ref: (S, OUT, C)    fused stage-conv + bottleneck-chunk maps
        # f_ref  : (1, OUT, KP)   output (written on last tile)
        # acc_ref: (C, KP)        pooled accumulator (scratch)
        t = pl.program_id(1)

        @pl.when(t == 0)
        def _init():
            acc_ref[...] = jnp.zeros_like(acc_ref)

        # accumulate pooled features for this spatial tile: (C, TR) @ (TR, KP)
        acc_ref[...] += jnp.dot(x_ref[0], a2t_ref[...],
                                preferred_element_type=jnp.float32)

        @pl.when(t == pl.num_programs(1) - 1)
        def _finalize():
            acc = acc_ref[...]
            col = jax.lax.broadcasted_iota(jnp.int32, (1, kp), 1)
            f = jnp.zeros(f_ref.shape[1:], jnp.float32)
            for s in range(num_stages):          # static unroll (S == 4)
                o, n = offs[s], cnts[s]
                p_s = jnp.dot(wft_ref[s], acc,
                              preferred_element_type=jnp.float32)
                f = jnp.where((col >= o) & (col < o + n), p_s, f)
            f_ref[0] = f

    return pool_kernel


# ---------------------------------------------------------------------------
# Kernel 2: bottleneck identity chunk + upsampled pyramid + bias + ReLU
# ---------------------------------------------------------------------------
def _head_kernel(x_ref, u2t_ref, f_ref, wbid_ref, bias_ref, o_ref):
    # x_ref   : (1, C, TR)    raw features (identity branch of the concat)
    # u2t_ref : (KP, TR)      upsample columns (U2^T) for this tile
    # f_ref   : (1, OUT, KP)  per-batch fused pyramid features (from kernel 1)
    # wbid_ref: (OUT, C)      identity chunk of the bottleneck conv
    # bias_ref: (OUT, 1)
    # o_ref   : (1, OUT, TR)
    acc = jnp.dot(wbid_ref[...], x_ref[0], preferred_element_type=jnp.float32)
    acc += jnp.dot(f_ref[0], u2t_ref[...], preferred_element_type=jnp.float32)
    acc += bias_ref[...]
    o_ref[0] = jnp.maximum(acc, 0.0).astype(o_ref.dtype)


# ---------------------------------------------------------------------------
# Wrapper: parameter packing + pallas_calls
# ---------------------------------------------------------------------------
def psp_module_pallas(x_nchw, stage_weights, wb, bias, sizes, row_tile=None):
    B, C, H, W = x_nchw.shape
    OUT = wb.shape[0]
    S = len(sizes)
    HW = H * W

    if row_tile is None:
        # biggest 128-multiple tile dividing H*W (lane-dense, amortizes grid-step
        # overhead); fall back to a full-row block otherwise.
        row_tile = next((t for t in (512, 384, 256, 128) if HW % t == 0), HW)
    assert HW % row_tile == 0
    assert row_tile % 128 == 0 or row_tile == HW
    n_tiles = HW // row_tile

    # ---- host-side operator packing (all tiny; each stage block 8-aligned) ----
    cnts = [-(-(s * s) // 8) * 8 for s in sizes]
    offs = [0]
    for c in cnts[:-1]:
        offs.append(offs[-1] + c)
    KP = sum(cnts)

    A2T = np.zeros((HW, KP), np.float32)   # pooling cols   (padding cols are zero)
    U2T = np.zeros((KP, HW), np.float32)   # upsample rows  (padding rows are zero)
    for i, s in enumerate(sizes):
        Ah, Aw = adaptive_avg_pool_matrix(H, s), adaptive_avg_pool_matrix(W, s)
        Uh, Uw = bilinear_upsample_matrix(H, s), bilinear_upsample_matrix(W, s)
        A2T[:, offs[i]:offs[i] + s * s] = np.kron(Ah, Aw).T
        U2T[offs[i]:offs[i] + s * s, :] = np.kron(Uh, Uw).T

    hp = jax.lax.Precision.HIGHEST
    # stage 1x1 conv (bias-free) folded into its bottleneck chunk: (OUT, C) each
    wft = jnp.stack([jnp.matmul(wb[:, i * C:(i + 1) * C], stage_weights[i],
                                precision=hp) for i in range(S)])
    wb_id = wb[:, S * C:(S + 1) * C]       # identity (raw-feature) chunk (OUT, C)
    bias_col = bias.reshape(OUT, 1)

    # NCHW -> (B, C, H*W): pure reshape, no transpose / HBM relayout
    x_pix = x_nchw.reshape(B, C, HW)

    # ---- kernel 1: pooled features + fused stage channel maps ----
    f = pl.pallas_call(
        _make_pool_kernel(S, offs, cnts, KP),
        out_shape=jax.ShapeDtypeStruct((B, OUT, KP), jnp.float32),
        grid=(B, n_tiles),
        in_specs=[
            pl.BlockSpec((1, C, row_tile), lambda b, t: (b, 0, t)),
            pl.BlockSpec((row_tile, KP), lambda b, t: (t, 0)),
            pl.BlockSpec((S, OUT, C), lambda b, t: (0, 0, 0)),
        ],
        out_specs=pl.BlockSpec((1, OUT, KP), lambda b, t: (b, 0, 0)),
        scratch_shapes=[pltpu.VMEM((C, KP), jnp.float32)],
        compiler_params=pltpu.CompilerParams(
            dimension_semantics=("parallel", "arbitrary")),
    )(x_pix, jnp.asarray(A2T), wft)

    # ---- kernel 2: bottleneck + pyramid upsample + bias + ReLU, tiled ----
    out_pix = pl.pallas_call(
        _head_kernel,
        out_shape=jax.ShapeDtypeStruct((B, OUT, HW), jnp.float32),
        grid=(B, n_tiles),
        in_specs=[
            pl.BlockSpec((1, C, row_tile), lambda b, t: (b, 0, t)),
            pl.BlockSpec((KP, row_tile), lambda b, t: (0, t)),
            pl.BlockSpec((1, OUT, KP), lambda b, t: (b, 0, 0)),
            pl.BlockSpec((OUT, C), lambda b, t: (0, 0)),
            pl.BlockSpec((OUT, 1), lambda b, t: (0, 0)),
        ],
        out_specs=pl.BlockSpec((1, OUT, row_tile), lambda b, t: (b, 0, t)),
        compiler_params=pltpu.CompilerParams(
            dimension_semantics=("parallel", "parallel")),
    )(x_pix, jnp.asarray(U2T), f, wb_id, bias_col)

    # (B, OUT, H*W) -> NCHW: pure reshape, no transpose
    return out_pix.reshape(B, OUT, H, W)


# ---------------------------------------------------------------------------
# Pure-JAX reference following the PyTorch op order (pool -> conv -> upsample)
# ---------------------------------------------------------------------------
def psp_reference(x_nchw, stage_weights, wb, bias, sizes):
    B, C, H, W = x_nchw.shape
    hp = jax.lax.Precision.HIGHEST
    priors = []
    for idx, size in enumerate(sizes):
        A_h = jnp.asarray(adaptive_avg_pool_matrix(H, size))
        A_w = jnp.asarray(adaptive_avg_pool_matrix(W, size))
        U_h = jnp.asarray(bilinear_upsample_matrix(H, size))
        U_w = jnp.asarray(bilinear_upsample_matrix(W, size))
        pooled = jnp.einsum('ph,bchw,qw->bcpq', A_h, x_nchw, A_w, precision=hp)
        conv = jnp.einsum('oc,bcpq->bopq', stage_weights[idx], pooled, precision=hp)
        up = jnp.einsum('hp,bopq,wq->bohw', U_h, conv, U_w, precision=hp)
        priors.append(up)
    priors.append(x_nchw)
    cat = jnp.concatenate(priors, axis=1)
    out = jnp.einsum('oc,bchw->bohw', wb, cat, precision=hp) + bias[None, :, None, None]
    return jnp.maximum(out, 0.0)


if __name__ == "__main__":
    B, C, H, W = 2, 128, 16, 16      # small but lane/sublane friendly
    OUT = 128                        # out_features stand-in, lane-dense
    sizes = (1, 2, 3, 6)

    key = jax.random.PRNGKey(0)
    k_x, k_s, k_wb, k_b = jax.random.split(key, 4)

    x = jax.random.normal(k_x, (B, C, H, W), dtype=jnp.float32)

    # Deterministic synthetic parameters (shapes from PSPModule.__init__).
    stage_keys = jax.random.split(k_s, len(sizes))
    stage_weights = [jax.random.normal(k, (C, C), dtype=jnp.float32) / np.sqrt(C)
                     for k in stage_keys]                          # 1x1 conv, no bias
    wb = jax.random.normal(k_wb, (OUT, C * (len(sizes) + 1)),
                           dtype=jnp.float32) / np.sqrt(C * (len(sizes) + 1))
    bias = 0.1 * jax.random.normal(k_b, (OUT,), dtype=jnp.float32)

    # row_tile=128 exercises the multi-tile pooled-accumulation path (H*W = 256)
    out = psp_module_pallas(x, stage_weights, wb, bias, sizes, row_tile=128)
    out = jax.block_until_ready(out)

    ref = jax.block_until_ready(psp_reference(x, stage_weights, wb, bias, sizes))

    assert out.shape == (B, OUT, H, W), out.shape
    max_err = float(jnp.max(jnp.abs(out - ref)))
    scale = max(1.0, float(jnp.max(jnp.abs(ref))))
    assert max_err / scale < 3e-3, f"mismatch vs reference: {max_err} (scale {scale})"

    print("KERNEL_OK")
</pallas_src>

<mosaic_0001>
module attributes {stable_mosaic.version = 11 : i64} {
  func.func @pool_kernel(%arg0: i32, %arg1: i32, %arg2: memref<1x128x128xf32, #tpu.memory_space<vmem>>, %arg3: memref<128x72xf32, #tpu.memory_space<vmem>>, %arg4: memref<4x128x128xf32, #tpu.memory_space<vmem>>, %arg5: memref<1x128x72xf32, #tpu.memory_space<vmem>>, %arg6: memref<128x72xf32, #tpu.memory_space<vmem>>) attributes {dimension_semantics = [#tpu.dimension_semantics<parallel>, #tpu.dimension_semantics<arbitrary>], iteration_bounds = array<i64: 2, 2>, scalar_prefetch = 0 : i64, scratch_operands = 1 : i64, tpu.core_type = #tpu.core_type<tc>, window_params = [{transform_indices = @transform_0, window_bounds = array<i64: 1, 128, 128>}, {transform_indices = @transform_1, window_bounds = array<i64: 128, 72>}, {pipeline_mode = #tpu.pipeline_mode<synchronous>, transform_indices = @transform_2, window_bounds = array<i64: 4, 128, 128>}, {transform_indices = @transform_3, window_bounds = array<i64: 1, 128, 72>}]} {
    %c0_i32 = arith.constant 0 : i32
    %0 = arith.cmpi eq, %arg1, %c0_i32 : i32
    %1 = arith.extui %0 : i1 to i32
    %c0_i32_0 = arith.constant 0 : i32
    %2 = arith.cmpi ne, %1, %c0_i32_0 : i32
    scf.if %2 {
      %cst_10 = arith.constant 0.000000e+00 : f32
      %13 = vector.broadcast %cst_10 : f32 to vector<128x72xf32>
      %c0_11 = arith.constant 0 : index
      %c0_12 = arith.constant 0 : index
      %14 = vector.load %arg6[%c0_11, %c0_12] : memref<128x72xf32, #tpu.memory_space<vmem>>, vector<128x72xf32>
      tpu.vector_store %arg6[%c0_11, %c0_12], %13 {strides = array<i32>} : memref<128x72xf32, #tpu.memory_space<vmem>>, vector<128x72xf32>,
    } else {
    }
    %c0 = arith.constant 0 : index
    %c0_1 = arith.constant 0 : index
    %3 = vector.load %arg6[%c0, %c0_1] : memref<128x72xf32, #tpu.memory_space<vmem>>, vector<128x72xf32>
    %c0_2 = arith.constant 0 : index
    %c0_3 = arith.constant 0 : index
    %c0_4 = arith.constant 0 : index
    %4 = vector.load %arg2[%c0_2, %c0_3, %c0_4] : memref<1x128x128xf32, #tpu.memory_space<vmem>>, vector<1x128x128xf32>
    %5 = vector.shape_cast %4 : vector<1x128x128xf32> to vector<128x128xf32>
    %c0_5 = arith.constant 0 : index
    %c0_6 = arith.constant 0 : index
    %6 = vector.load %arg3[%c0_5, %c0_6] : memref<128x72xf32, #tpu.memory_space<vmem>>, vector<128x72xf32>
    %cst = arith.constant dense<0.000000e+00> : vector<128x72xf32>
    %7 = tpu.matmul %5, %6, %cst {dimension_numbers = #tpu.dot_dimension_numbers<[1], [0], [0], [1], [0, 0, 1, 1], [], []>} : vector<128x128xf32>, vector<128x72xf32>, vector<128x72xf32> -> vector<128x72xf32>
    %8 = arith.addf %3, %7 : vector<128x72xf32>
    %c0_7 = arith.constant 0 : index
    %c0_8 = arith.constant 0 : index
    %9 = vector.load %arg6[%c0_7, %c0_8] : memref<128x72xf32, #tpu.memory_space<vmem>>, vector<128x72xf32>
    tpu.vector_store %arg6[%c0_7, %c0_8], %8 {strides = array<i32>} : memref<128x72xf32, #tpu.memory_space<vmem>>, vector<128x72xf32>,
    %c1_i32 = arith.constant 1 : i32
    %10 = arith.cmpi eq, %arg1, %c1_i32 : i32
    %11 = arith.extui %10 : i1 to i32
    %c0_i32_9 = arith.constant 0 : i32
    %12 = arith.cmpi ne, %11, %c0_i32_9 : i32
    scf.if %12 {
      %c0_10 = arith.constant 0 : index
      %c0_11 = arith.constant 0 : index
      %13 = vector.load %arg6[%c0_10, %c0_11] : memref<128x72xf32, #tpu.memory_space<vmem>>, vector<128x72xf32>
      %14 = tpu.iota {dimensions = array<i32: 1>} : vector<1x72xi32>
      %cst_12 = arith.constant 0.000000e+00 : f32
      %15 = vector.broadcast %cst_12 : f32 to vector<128x72xf32>
      %c0_13 = arith.constant 0 : index
      %c0_14 = arith.constant 0 : index
      %c0_15 = arith.constant 0 : index
      %16 = vector.load %arg4[%c0_13, %c0_14, %c0_15] : memref<4x128x128xf32, #tpu.memory_space<vmem>>, vector<1x128x128xf32>
      %17 = vector.shape_cast %16 : vector<1x128x128xf32> to vector<128x128xf32>
      %cst_16 = arith.constant dense<0.000000e+00> : vector<128x72xf32>
      %18 = tpu.matmul %17, %13, %cst_16 {dimension_numbers = #tpu.dot_dimension_numbers<[1], [0], [0], [1], [0, 0, 1, 1], [], []>} : vector<128x128xf32>, vector<128x72xf32>, vector<128x72xf32> -> vector<128x72xf32>
      %c0_i32_17 = arith.constant 0 : i32
      %19 = vector.broadcast %c0_i32_17 : i32 to vector<1x72xi32>
      %20 = arith.cmpi sge, %14, %19 : vector<1x72xi32>
      %c8_i32 = arith.constant 8 : i32
      %21 = vector.broadcast %c8_i32 : i32 to vector<1x72xi32>
      %22 = arith.cmpi slt, %14, %21 : vector<1x72xi32>
      %23 = arith.andi %20, %22 : vector<1x72xi1>
      %24 = vector.shape_cast %23 : vector<1x72xi1> to vector<1x72xi1>
      %25 = vector.broadcast %24 : vector<1x72xi1> to vector<128x72xi1>
      %26 = arith.select %25, %18, %15 : vector<128x72xi1>, vector<128x72xf32>
      %c1 = arith.constant 1 : index
      %c0_18 = arith.constant 0 : index
      %c0_19 = arith.constant 0 : index
      %27 = vector.load %arg4[%c1, %c0_18, %c0_19] : memref<4x128x128xf32, #tpu.memory_space<vmem>>, vector<1x128x128xf32>
      %28 = vector.shape_cast %27 : vector<1x128x128xf32> to vector<128x128xf32>
      %cst_20 = arith.constant dense<0.000000e+00> : vector<128x72xf32>
      %29 = tpu.matmul %28, %13, %cst_20 {dimension_numbers = #tpu.dot_dimension_numbers<[1], [0], [0], [1], [0, 0, 1, 1], [], []>} : vector<128x128xf32>, vector<128x72xf32>, vector<128x72xf32> -> vector<128x72xf32>
      %c8_i32_21 = arith.constant 8 : i32
      %30 = vector.broadcast %c8_i32_21 : i32 to vector<1x72xi32>
      %31 = arith.cmpi sge, %14, %30 : vector<1x72xi32>
      %c16_i32 = arith.constant 16 : i32
      %32 = vector.broadcast %c16_i32 : i32 to vector<1x72xi32>
      %33 = arith.cmpi slt, %14, %32 : vector<1x72xi32>
      %34 = arith.andi %31, %33 : vector<1x72xi1>
      %35 = vector.shape_cast %34 : vector<1x72xi1> to vector<1x72xi1>
      %36 = vector.broadcast %35 : vector<1x72xi1> to vector<128x72xi1>
      %37 = arith.select %36, %29, %26 : vector<128x72xi1>, vector<128x72xf32>
      %c2 = arith.constant 2 : index
      %c0_22 = arith.constant 0 : index
      %c0_23 = arith.constant 0 : index
      %38 = vector.load %arg4[%c2, %c0_22, %c0_23] : memref<4x128x128xf32, #tpu.memory_space<vmem>>, vector<1x128x128xf32>
      %39 = vector.shape_cast %38 : vector<1x128x128xf32> to vector<128x128xf32>
      %cst_24 = arith.constant dense<0.000000e+00> : vector<128x72xf32>
      %40 = tpu.matmul %39, %13, %cst_24 {dimension_numbers = #tpu.dot_dimension_numbers<[1], [0], [0], [1], [0, 0, 1, 1], [], []>} : vector<128x128xf32>, vector<128x72xf32>, vector<128x72xf32> -> vector<128x72xf32>
      %c16_i32_25 = arith.constant 16 : i32
      %41 = vector.broadcast %c16_i32_25 : i32 to vector<1x72xi32>
      %42 = arith.cmpi sge, %14, %41 : vector<1x72xi32>
      %c32_i32 = arith.constant 32 : i32
      %43 = vector.broadcast %c32_i32 : i32 to vector<1x72xi32>
      %44 = arith.cmpi slt, %14, %43 : vector<1x72xi32>
      %45 = arith.andi %42, %44 : vector<1x72xi1>
      %46 = vector.shape_cast %45 : vector<1x72xi1> to vector<1x72xi1>
      %47 = vector.broadcast %46 : vector<1x72xi1> to vector<128x72xi1>
      %48 = arith.select %47, %40, %37 : vector<128x72xi1>, vector<128x72xf32>
      %c3 = arith.constant 3 : index
      %c0_26 = arith.constant 0 : index
      %c0_27 = arith.constant 0 : index
      %49 = vector.load %arg4[%c3, %c0_26, %c0_27] : memref<4x128x128xf32, #tpu.memory_space<vmem>>, vector<1x128x128xf32>
      %50 = vector.shape_cast %49 : vector<1x128x128xf32> to vector<128x128xf32>
      %cst_28 = arith.constant dense<0.000000e+00> : vector<128x72xf32>
      %51 = tpu.matmul %50, %13, %cst_28 {dimension_numbers = #tpu.dot_dimension_numbers<[1], [0], [0], [1], [0, 0, 1, 1], [], []>} : vector<128x128xf32>, vector<128x72xf32>, vector<128x72xf32> -> vector<128x72xf32>
      %c32_i32_29 = arith.constant 32 : i32
      %52 = vector.broadcast %c32_i32_29 : i32 to vector<1x72xi32>
      %53 = arith.cmpi sge, %14, %52 : vector<1x72xi32>
      %c72_i32 = arith.constant 72 : i32
      %54 = vector.broadcast %c72_i32 : i32 to vector<1x72xi32>
      %55 = arith.cmpi slt, %14, %54 : vector<1x72xi32>
      %56 = arith.andi %53, %55 : vector<1x72xi1>
      %57 = vector.shape_cast %56 : vector<1x72xi1> to vector<1x72xi1>
      %58 = vector.broadcast %57 : vector<1x72xi1> to vector<128x72xi1>
      %59 = arith.select %58, %51, %48 : vector<128x72xi1>, vector<128x72xf32>
      %c0_30 = arith.constant 0 : index
      %c0_31 = arith.constant 0 : index
      %c0_32 = arith.constant 0 : index
      %60 = vector.load %arg5[%c0_30, %c0_31, %c0_32] : memref<1x128x72xf32, #tpu.memory_space<vmem>>, vector<1x128x72xf32>
      %61 = vector.shape_cast %60 : vector<1x128x72xf32> to vector<128x72xf32>
      %62 = vector.shape_cast %59 : vector<128x72xf32> to vector<1x128x72xf32>
      tpu.vector_store %arg5[%c0_30, %c0_31, %c0_32], %62 {strides = array<i32>} : memref<1x128x72xf32, #tpu.memory_space<vmem>>, vector<1x128x72xf32>,
    } else {
    }
    return
  }
  func.func @transform_0(%arg0: i32, %arg1: i32) -> (i32, i32, i32) {
    %c0_i32 = arith.constant 0 : i32
    %c0_i32_0 = arith.constant 0 : i32
    return %arg0, %c0_i32, %arg1 : i32, i32, i32
  }
  func.func @transform_1(%arg0: i32, %arg1: i32) -> (i32, i32) {
    %c0_i32 = arith.constant 0 : i32
    %c0_i32_0 = arith.constant 0 : i32
    return %arg1, %c0_i32 : i32, i32
  }
  func.func @transform_2(%arg0: i32, %arg1: i32) -> (i32, i32, i32) {
    %c0_i32 = arith.constant 0 : i32
    %c0_i32_0 = arith.constant 0 : i32
    %c0_i32_1 = arith.constant 0 : i32
    %c0_i32_2 = arith.constant 0 : i32
    return %c0_i32, %c0_i32_0, %c0_i32_1 : i32, i32, i32
  }
  func.func @transform_3(%arg0: i32, %arg1: i32) -> (i32, i32, i32) {
    %c0_i32 = arith.constant 0 : i32
    %c0_i32_0 = arith.constant 0 : i32
    %c0_i32_1 = arith.constant 0 : i32
    return %arg0, %c0_i32, %c0_i32_0 : i32, i32, i32
  }
}

</mosaic_0001>

<llo_original>
// kernel: tpu_custom_call.1
$region0: #{tpu_custom_call.1}
  #allocation0 [shape = 'u32[]', space=smem, size = 0x4, offset = 0x4, fixed_abs, tag = 'smem constant byte address 0x4 - core index']
  #allocation1 [shape = 'u32[144,128]{1,0:T(1,128)}', space=vmem, size = 0x12000, scoped, tag = 'internal scratch']
  #allocation2 [shape = 'f32[128,72]{1,0:T(8,128)}', space=vmem, size = 0x10000, scoped, tag = 'scratch operand']
  %s0 = inlined_call_operand.hbm [shape: f32[2,128,256], index: 0, kind: input, shape index: {}]
  %s1 = inlined_call_operand.vmem [shape: f32[256,72], index: 1, kind: input, shape index: {}]
  %s2 = inlined_call_operand.hbm [shape: f32[4,128,128], index: 2, kind: input, shape index: {}]
  %s3 = inlined_call_operand.vmem [shape: f32[2,128,72], index: 3, kind: output, shape index: {}]
  %s4 = sld [smem:[#allocation0]]
  $region61: #{tpu_custom_call.1} parent=0
    _
  %s6 = ssub.s32 1, %s4
  %s7 = scalar_select 0, %s6, %s4
  $region1: #{tpu_custom_call.1} parent=0
    #allocation3 [shape = 'u8[131072]{0}', space=vmem, size = 0x20000, scoped, tag = 'input window, operand 0']
    #allocation4 [shape = 's32[2]{0}', space=sflag, size = 0x8, scoped, tag = 'scoped memory for tpu_custom_call.1']
    #allocation5 [shape = 'u8[262144]{0}', space=vmem, size = 0x40000, scoped, tag = 'input window, operand 2, single buffered']
    #allocation6 [shape = 's32[1]{0}', space=sflag, size = 0x4, scoped, tag = 'scoped memory for tpu_custom_call.1']
    %8 = vsyncpa [#allocation4], 0
    %s9 = scalar_lea.sflag [#allocation4], 1
    %10 = vsyncpa %s9, 0
    %11 = vsyncpa [#allocation6], 0
    loop: start=0, step=1, limit=6
    $region2: #{tpu_custom_call.1} parent=1 // loop_pre_header
      _
    $region3: #{tpu_custom_call.1} parent=1 // loop_header
      %s13 = sphi 0, %s17
      %p14 = scmp.ge.s32.totalorder %s13, 6
      %s20 = sphi 0, %s32
      %s21 = sphi 0, %s28
      %s22 = sphi 0, %s20
      %s23 = sphi 0, %s21
      %s24 = sphi 0, %s22
      %s25 = sphi 0, %s23
      %s37 = sphi 0, %s39
      %s40 = sphi 0, %s37
      %s41 = sphi 0, %s40
      %s57 = sphi 0, %s41
      %s63 = sphi 0, %s65
      %s66 = sphi 0, %s63
      %s67 = sphi 0, %s66
      %s83 = sphi 0, %s67
      %s87 = sphi 0, %s87
      %s89 = sphi 0, %s87
      %s90 = sphi 0, %s89
      %s104 = sphi 0, %s90
      %s110 = sphi 0, %s112
      %s113 = sphi 0, %s110
      %s114 = sphi 0, %s113
      %s130 = sphi 0, %s114
    $region4: #{tpu_custom_call.1} parent=1 // loop_header_branch
      %16 = sbr.rel (%p14) target = $region8
    $region5: #{tpu_custom_call.1} parent=1 // loop_body
      %s18 = ssub.s32 %s13, 1
      %s19 = ssub.s32 %s13, 2
      %s26 = sadd.s32 1, %s21
      %p27 = scmp.ge.s32.totalorder %s26, 2
      %s28 = scalar_select %p27, 0, %s26
      %s29 = sadd.s32 1, %s20
      %s30 = scalar_select %p27, %s29, %s20
      %p31 = scmp.ge.s32.totalorder %s30, 2
      %s32 = scalar_select %p31, 0, %s30
      %s33 = ssub.s32 %s20, %s32
      %s34 = ssub.s32 %s21, %s28
      %s35 = sor.u32 %s33, %s34
      %p36 = scmp.eq.s32.totalorder %s35, 0
      %s38 = sadd.s32 %s37, 1
      %s39 = scalar_select %p36, %s37, %s38
      %p42 = pneg %p36
      %p43 = scmp.eq.s32.totalorder %s13, 3
      %p44 = por %p42, %p43
      %p45 = scmp.ne.s32.totalorder %s37, %s40
      %p46 = scmp.eq.s32.totalorder %s13, 0
      %p47 = por %p45, %p46
      %p48 = scmp.ne.s32.totalorder %s37, %s40
      %p49 = scmp.eq.s32.totalorder %s18, 3
      %p50 = por %p48, %p49
      %p51 = scmp.ne.s32.totalorder %s40, %s41
      %p52 = scmp.eq.s32.totalorder %s18, 0
      %p53 = por %p51, %p52
      %p54 = scmp.ne.s32.totalorder %s40, %s41
      %p55 = scmp.eq.s32.totalorder %s19, 3
      %p56 = por %p54, %p55
      %p58 = scmp.ne.s32.totalorder %s41, %s57
      %p59 = scmp.eq.s32.totalorder %s19, 0
      %p60 = por %p58, %p59
      %s61 = ssub.s32 %s21, %s28
      %p62 = scmp.eq.s32.totalorder %s61, 0
      %s64 = sadd.s32 %s63, 1
      %s65 = scalar_select %p62, %s63, %s64
      %p68 = pneg %p62
      %p69 = scmp.eq.s32.totalorder %s13, 3
      %p70 = por %p68, %p69
      %p71 = scmp.ne.s32.totalorder %s63, %s66
      %p72 = scmp.eq.s32.totalorder %s13, 0
      %p73 = por %p71, %p72
      %p74 = scmp.ne.s32.totalorder %s63, %s66
      %p75 = scmp.eq.s32.totalorder %s18, 3
      %p76 = por %p74, %p75
      %p77 = scmp.ne.s32.totalorder %s66, %s67
      %p78 = scmp.eq.s32.totalorder %s18, 0
      %p79 = por %p77, %p78
      %p80 = scmp.ne.s32.totalorder %s66, %s67
      %p81 = scmp.eq.s32.totalorder %s19, 3
      %p82 = por %p80, %p81
      %p84 = scmp.ne.s32.totalorder %s67, %s83
      %p85 = scmp.eq.s32.totalorder %s19, 0
      %p86 = por %p84, %p85
      %s88 = sadd.s32 %s87, 1
      %p91 = scmp.eq.s32.totalorder %s13, 3
      %p92 = scmp.ne.s32.totalorder %s87, %s89
      %p93 = scmp.eq.s32.totalorder %s13, 0
      %p94 = por %p92, %p93
      %p95 = scmp.ne.s32.totalorder %s87, %s89
      %p96 = scmp.eq.s32.totalorder %s18, 3
      %p97 = por %p95, %p96
      %p98 = scmp.ne.s32.totalorder %s89, %s90
      %p99 = scmp.eq.s32.totalorder %s18, 0
      %p100 = por %p98, %p99
      %p101 = scmp.ne.s32.totalorder %s89, %s90
      %p102 = scmp.eq.s32.totalorder %s19, 3
      %p103 = por %p101, %p102
      %p105 = scmp.ne.s32.totalorder %s90, %s104
      %p106 = scmp.eq.s32.totalorder %s19, 0
      %p107 = por %p105, %p106
      %s108 = ssub.s32 %s20, %s32
      %p109 = scmp.eq.s32.totalorder %s108, 0
      %s111 = sadd.s32 %s110, 1
      %s112 = scalar_select %p109, %s110, %s111
      %p115 = pneg %p109
      %p116 = scmp.eq.s32.totalorder %s13, 3
      %p117 = por %p115, %p116
      %p118 = scmp.ne.s32.totalorder %s110, %s113
      %p119 = scmp.eq.s32.totalorder %s13, 0
      %p120 = por %p118, %p119
      %p121 = scmp.ne.s32.totalorder %s110, %s113
      %p122 = scmp.eq.s32.totalorder %s18, 3
      %p123 = por %p121, %p122
      %p124 = scmp.ne.s32.totalorder %s113, %s114
      %p125 = scmp.eq.s32.totalorder %s18, 0
      %p126 = por %p124, %p125
      %p127 = scmp.ne.s32.totalorder %s113, %s114
      %p128 = scmp.eq.s32.totalorder %s19, 3
      %p129 = por %p127, %p128
      %p131 = scmp.ne.s32.totalorder %s114, %s130
      %p132 = scmp.eq.s32.totalorder %s19, 0
      %p133 = por %p131, %p132
      %p134 = scmp.le.s32.totalorder 1, %s13
      %p135 = scmp.lt.s32.totalorder %s13, 5
      %p136 = pnand %p134, %p135
      %p137 = pneg %p136
      // Predicated region
      $region9: #{tpu_custom_call.1} parent=5 // pred_check
        _
      $region10: #{tpu_custom_call.1} parent=5 // pred_check_branch
        %139 = sbr.rel (%p136) target = $region12
      $region11: #{tpu_custom_call.1} parent=5 // pred_region
        %s140 = ssub.s32 %s13, 1
        // Predicated region
        $region13: #{tpu_custom_call.1} parent=11 // pred_check
          %p141 = pneg %p100
        $region14: #{tpu_custom_call.1} parent=11 // pred_check_branch
          %143 = sbr.rel (%p141) target = $region16
        $region15: #{tpu_custom_call.1} parent=11 // pred_region
          %s145 = ssub.s32 8192, 8192
          %146 = vsyncadd [#allocation6], %s145
          %s147 = sshll.u32 [#allocation5], 4
          %s148 = int_to_ptr.vmem [resolvable:$true] %s147
          %153 = dma.hbm_to_vmem [thread:$0]  %s2, 8192, %s148, [#allocation6], 128, 128, 8
        $region16: #{tpu_custom_call.1} parent=11 // pred_fallthru
          _
      $region12: #{tpu_custom_call.1} parent=5 // pred_fallthru
        _
      %p154 = scmp.lt.s32.totalorder %s13, 4
      // Predicated region
      $region17: #{tpu_custom_call.1} parent=5 // pred_check
        %p155 = pneg %p154
      $region18: #{tpu_custom_call.1} parent=5 // pred_check_branch
        %157 = sbr.rel (%p155) target = $region20
      $region19: #{tpu_custom_call.1} parent=5 // pred_region
        // Predicated region
        $region21: #{tpu_custom_call.1} parent=19 // pred_check
          %p158 = pneg %p47
        $region22: #{tpu_custom_call.1} parent=19 // pred_check_branch
          %160 = sbr.rel (%p158) target = $region24
        $region23: #{tpu_custom_call.1} parent=19 // pred_region
          %s161 = sand.u32 %s37, 1
          %s162 = scalar_lea.sflag [#allocation4], %s161
          %s163 = sand.u32 %s37, 1
          %s164 = smul.addr %s163, 128
          %s165 = scalar_lea.vmem [#allocation3], %s164
          %s167 = ssub.s32 2048, 2048
          %168 = vsyncadd %s162, %s167
          %s169 = smul.addr %s20, 32
          %s170 = sadd.s32 %s21, %s169
          %s171 = smul.addr %s170, 128
          %s172 = scalar_lea.hbm %s0, %s171
          %s173 = sshll.u32 %s165, 4
          %s174 = int_to_ptr.vmem [resolvable:$true] %s173
          %179 = dma.hbm_to_vmem [thread:$0]  %s172, 2048, %s174, %s162, 256, 128, 8
        $region24: #{tpu_custom_call.1} parent=19 // pred_fallthru
          _
        // Predicated region
        $region25: #{tpu_custom_call.1} parent=19 // pred_check
          %p180 = pneg %p73
        $region26: #{tpu_custom_call.1} parent=19 // pred_check_branch
          %182 = sbr.rel (%p180) target = $region28
        $region27: #{tpu_custom_call.1} parent=19 // pred_region
          %s183 = smul.u32 16, %s21
          %p184 = scmp.lt.s32.totalorder %s183, 31
          %s185 = scalar_select %p184, %s183, 31
          %s186 = smul.addr %s185, 8
          %s187 = scalar_lea.vmem %s1, %s186
          %s188 = smul.u32 16, %s21
        $region28: #{tpu_custom_call.1} parent=19 // pred_fallthru
          _
      $region20: #{tpu_custom_call.1} parent=5 // pred_fallthru
        _
      %p189 = scmp.le.s32.totalorder 1, %s13
      %p190 = scmp.lt.s32.totalorder %s13, 5
      %p191 = pnand %p189, %p190
      %p192 = pneg %p191
      // Predicated region
      $region29: #{tpu_custom_call.1} parent=5 // pred_check
        _
      $region30: #{tpu_custom_call.1} parent=5 // pred_check_branch
        %194 = sbr.rel (%p191) target = $region32
      $region31: #{tpu_custom_call.1} parent=5 // pred_region
        %s195 = ssub.s32 %s13, 1
        %s196 = sand.u32 %s40, 1
        %s197 = scalar_lea.sflag [#allocation4], %s196
        %s198 = sand.u32 %s40, 1
        %s199 = smul.addr %s198, 128
        %s200 = scalar_lea.vmem [#allocation3], %s199
        // Predicated region
        $region33: #{tpu_custom_call.1} parent=31 // pred_check
          %p201 = pneg %p53
        $region34: #{tpu_custom_call.1} parent=31 // pred_check_branch
          %203 = sbr.rel (%p201) target = $region36
        $region35: #{tpu_custom_call.1} parent=31 // pred_region
          %204 = dma.done %s197, 2048
        $region36: #{tpu_custom_call.1} parent=31 // pred_fallthru
          _
        // Predicated region
        $region37: #{tpu_custom_call.1} parent=31 // pred_check
          %p205 = pneg %p100
        $region38: #{tpu_custom_call.1} parent=31 // pred_check_branch
          %207 = sbr.rel (%p205) target = $region40
        $region39: #{tpu_custom_call.1} parent=31 // pred_region
          %208 = dma.done [#allocation6], 8192
        $region40: #{tpu_custom_call.1} parent=31 // pred_fallthru
          _
        %s209 = sand.u32 %s40, 1
        %s210 = scalar_lea.sflag [#allocation4], %s209
        %s211 = sand.u32 %s40, 1
        %s212 = smul.addr %s211, 128
        %s213 = scalar_lea.vmem [#allocation3], %s212
        %p214 = pneg %p53
        %p215 = pneg %p50
        %s216 = smul.u32 16, %s23
        %p217 = scmp.lt.s32.totalorder %s216, 31
        %s218 = scalar_select %p217, %s216, 31
        %s219 = smul.addr %s218, 8
        %s220 = scalar_lea.vmem %s1, %s219
        %p221 = pneg %p79
        %p222 = pneg %p76
        %p223 = pneg %p100
        %p224 = pneg %p97
        %p225 = pneg %p126
        %p226 = pneg %p123
        %p227 = scmp.lt.s32.totalorder %s22, 1
        %s228 = scalar_select %p227, %s22, 1
        %s229 = smul.addr %s228, 16
        %s230 = smul.addr %s229, 8
        %s231 = scalar_lea.vmem %s3, %s230
        %s232 = smul.u32 16, %s23
        %p233 = scmp.lt.s32.totalorder %s232, 31
        %s234 = scalar_select %p233, %s232, 31
        %s235 = smul.addr %s234, 8
        %s236 = scalar_lea.vmem %s1, %s235
        %s237 = smul.u32 16, %s23
        %p238 = scmp.lt.s32.totalorder %s22, 1
        %s239 = scalar_select %p238, %s22, 1
        %s240 = smul.addr %s239, 16
        %s241 = smul.addr %s240, 8
        %s242 = scalar_lea.vmem %s3, %s241
        %p243 = scmp.eq.s32.totalorder %s23, 0
        // Predicated region
        $region41: #{tpu_custom_call.1} parent=31 // pred_check
          %p244 = pneg %p243
        $region42: #{tpu_custom_call.1} parent=31 // pred_check_branch
          %246 = sbr.rel (%p244) target = $region44
        $region43: #{tpu_custom_call.1} parent=31 // pred_region
          %vm247 = vcmask 588800
          %248 = vst.msk [vmem:[#allocation2] sm:$0xff] %vm247, 0.0
          %249 = vst.msk [vmem:[#allocation2 + $0x8] sm:$0xff] %vm247, 0.0
          %250 = vst.msk [vmem:[#allocation2 + $0x10] sm:$0xff] %vm247, 0.0
          %251 = vst.msk [vmem:[#allocation2 + $0x18] sm:$0xff] %vm247, 0.0
          %252 = vst.msk [vmem:[#allocation2 + $0x20] sm:$0xff] %vm247, 0.0
          %253 = vst.msk [vmem:[#allocation2 + $0x28] sm:$0xff] %vm247, 0.0
          %254 = vst.msk [vmem:[#allocation2 + $0x30] sm:$0xff] %vm247, 0.0
          %255 = vst.msk [vmem:[#allocation2 + $0x38] sm:$0xff] %vm247, 0.0
          %256 = vst.msk [vmem:[#allocation2 + $0x40] sm:$0xff] %vm247, 0.0
          %257 = vst.msk [vmem:[#allocation2 + $0x48] sm:$0xff] %vm247, 0.0
          %258 = vst.msk [vmem:[#allocation2 + $0x50] sm:$0xff] %vm247, 0.0
          %259 = vst.msk [vmem:[#allocation2 + $0x58] sm:$0xff] %vm247, 0.0
          %260 = vst.msk [vmem:[#allocation2 + $0x60] sm:$0xff] %vm247, 0.0
          %261 = vst.msk [vmem:[#allocation2 + $0x68] sm:$0xff] %vm247, 0.0
          %262 = vst.msk [vmem:[#allocation2 + $0x70] sm:$0xff] %vm247, 0.0
          %263 = vst.msk [vmem:[#allocation2 + $0x78] sm:$0xff] %vm247, 0.0
        $region44: #{tpu_custom_call.1} parent=31 // pred_fallthru
          _
        %v264 = vld [vmem:[#allocation2] sm:$0xff]
        %v265 = vld [vmem:[#allocation2 + $0x8] sm:$0xff]
        %v266 = vld [vmem:[#allocation2 + $0x10] sm:$0xff]
        %v267 = vld [vmem:[#allocation2 + $0x18] sm:$0xff]
        %v268 = vld [vmem:[#allocation2 + $0x20] sm:$0xff]
        %v269 = vld [vmem:[#allocation2 + $0x28] sm:$0xff]
        %v270 = vld [vmem:[#allocation2 + $0x30] sm:$0xff]
        %v271 = vld [vmem:[#allocation2 + $0x38] sm:$0xff]
        %v272 = vld [vmem:[#allocation2 + $0x40] sm:$0xff]
        %v273 = vld [vmem:[#allocation2 + $0x48] sm:$0xff]
        %v274 = vld [vmem:[#allocation2 + $0x50] sm:$0xff]
        %v275 = vld [vmem:[#allocation2 + $0x58] sm:$0xff]
        %v276 = vld [vmem:[#allocation2 + $0x60] sm:$0xff]
        %v277 = vld [vmem:[#allocation2 + $0x68] sm:$0xff]
        %v278 = vld [vmem:[#allocation2 + $0x70] sm:$0xff]
        %v279 = vld [vmem:[#allocation2 + $0x78] sm:$0xff]
        %v280 = vld [vmem:[%s200] sm:$0xff]
        %v281 = vld [vmem:[%s200 + $0x8] sm:$0xff]
        %v282 = vld [vmem:[%s200 + $0x10] sm:$0xff]
        %v283 = vld [vmem:[%s200 + $0x18] sm:$0xff]
        %v284 = vld [vmem:[%s200 + $0x20] sm:$0xff]
        %v285 = vld [vmem:[%s200 + $0x28] sm:$0xff]
        %v286 = vld [vmem:[%s200 + $0x30] sm:$0xff]
        %v287 = vld [vmem:[%s200 + $0x38] sm:$0xff]
        %v288 = vld [vmem:[%s200 + $0x40] sm:$0xff]
        %v289 = vld [vmem:[%s200 + $0x48] sm:$0xff]
        %v290 = vld [vmem:[%s200 + $0x50] sm:$0xff]
        %v291 = vld [vmem:[%s200 + $0x58] sm:$0xff]
        %v292 = vld [vmem:[%s200 + $0x60] sm:$0xff]
        %v293 = vld [vmem:[%s200 + $0x68] sm:$0xff]
        %v294 = vld [vmem:[%s200 + $0x70] sm:$0xff]
        %v295 = vld [vmem:[%s200 + $0x78] sm:$0xff]
        %v296 = vld [vmem:[%s236] sm:$0xff]
        %v297 = vld [vmem:[%s236 + $0x8] sm:$0xff]
        %v298 = vld [vmem:[%s236 + $0x10] sm:$0xff]
        %v299 = vld [vmem:[%s236 + $0x18] sm:$0xff]
        %v300 = vld [vmem:[%s236 + $0x20] sm:$0xff]
        %v301 = vld [vmem:[%s236 + $0x28] sm:$0xff]
        %v302 = vld [vmem:[%s236 + $0x30] sm:$0xff]
        %v303 = vld [vmem:[%s236 + $0x38] sm:$0xff]
        %v304 = vld [vmem:[%s236 + $0x40] sm:$0xff]
        %v305 = vld [vmem:[%s236 + $0x48] sm:$0xff]
        %v306 = vld [vmem:[%s236 + $0x50] sm:$0xff]
        %v307 = vld [vmem:[%s236 + $0x58] sm:$0xff]
        %v308 = vld [vmem:[%s236 + $0x60] sm:$0xff]
        %v309 = vld [vmem:[%s236 + $0x68] sm:$0xff]
        %v310 = vld [vmem:[%s236 + $0x70] sm:$0xff]
        %v311 = vld [vmem:[%s236 + $0x78] sm:$0xff]
        %312 = vmatprep.subr.mxu0 0.0
        %313 = vmatpush1.msra.mxu0 %v311
        %314 = vmatprep.subr.mxu0 0.0
        %315 = vmatpush1.msra.mxu0 %v310
        %316 = vmatprep.subr.mxu0 0.0
        %317 = vmatpush1.msra.mxu0 %v309
        %318 = vmatprep.subr.mxu0 0.0
        %319 = vmatpush1.msra.mxu0 %v308
        %320 = vmatprep.subr.mxu0 0.0
        %321 = vmatpush1.msra.mxu0 %v307
        %322 = vmatprep.subr.mxu0 0.0
        %323 = vmatpush1.msra.mxu0 %v306
        %324 = vmatprep.subr.mxu0 0.0
        %325 = vmatpush1.msra.mxu0 %v305
        %326 = vmatprep.subr.mxu0 0.0
        %327 = vmatpush1.msra.mxu0 %v304
        %328 = vmatprep.subr.mxu0 0.0
        %329 = vmatpush1.msra.mxu0 %v303
        %330 = vmatprep.subr.mxu0 0.0
        %331 = vmatpush1.msra.mxu0 %v302
        %332 = vmatprep.subr.mxu0 0.0
        %333 = vmatpush1.msra.mxu0 %v301
        %334 = vmatprep.subr.mxu0 0.0
        %335 = vmatpush1.msra.mxu0 %v300
        %336 = vmatprep.subr.mxu0 0.0
        %337 = vmatpush1.msra.mxu0 %v299
        %338 = vmatprep.subr.mxu0 0.0
        %339 = vmatpush1.msra.mxu0 %v298
        %340 = vmatprep.subr.mxu0 0.0
        %341 = vmatpush1.msra.mxu0 %v297
        %342 = vmatprep.subr.mxu0 0.0
        %343 = vmatpush1.msra.mxu0 %v296
        %344 = vmatprep.subr.mxu0 0.0
        %345 = vmatpush2.msra.mxu0 0.0
        %346 = vmatprep.subr.mxu0 0.0
        %347 = vmatpush2.msra.mxu0 0.0
        %348 = vmatprep.subr.mxu0 0.0
        %349 = vmatpush2.msra.mxu0 0.0
        %350 = vmatprep.subr.mxu0 0.0
        %351 = vmatpush2.msra.mxu0 0.0
        %352 = vmatprep.subr.mxu0 0.0
        %353 = vmatpush2.msra.mxu0 0.0
        %354 = vmatprep.subr.mxu0 0.0
        %355 = vmatpush2.msra.mxu0 0.0
        %356 = vmatprep.subr.mxu0 0.0
        %357 = vmatpush2.msra.mxu0 0.0
        %358 = vmatprep.subr.mxu0 0.0
        %359 = vmatpush2.msra.mxu0 0.0
        %360 = vmatprep.subr.mxu0 0.0
        %361 = vmatpush2.msra.mxu0 0.0
        %362 = vmatprep.subr.mxu0 0.0
        %363 = vmatpush2.msra.mxu0 0.0
        %364 = vmatprep.subr.mxu0 0.0
        %365 = vmatpush2.msra.mxu0 0.0
        %366 = vmatprep.subr.mxu0 0.0
        %367 = vmatpush2.msra.mxu0 0.0
        %368 = vmatprep.subr.mxu0 0.0
        %369 = vmatpush2.msra.mxu0 0.0
        %370 = vmatprep.subr.mxu0 0.0
        %371 = vmatpush2.msra.mxu0 0.0
        %372 = vmatprep.subr.mxu0 0.0
        %373 = vmatpush2.msra.mxu0 0.0
        %374 = vmatprep.subr.mxu0 0.0
        %375 = vmatpush2.msra.mxu0 0.0
        %376 = vmatprep.mubr.f32.mxu0 0.0
        %377 = vmatmul.mubr.f32.gmra.mxu0 %v280
        %v378 = vpop.f32.mrf.mxu0
        %v379 = vadd.f32 0.0, %v378
        %v380 = vpop.f32.mrf.mxu0
        %381 = vmatprep.mubr.f32.mxu0 0.0
        %382 = vmatmul.mubr.f32.gmra.mxu0 %v281
        %v383 = vpop.f32.mrf.mxu0
        %v384 = vadd.f32 0.0, %v383
        %v385 = vpop.f32.mrf.mxu0
        %386 = vmatprep.mubr.f32.mxu0 0.0
        %387 = vmatmul.mubr.f32.gmra.mxu0 %v282
        %v388 = vpop.f32.mrf.mxu0
        %v389 = vadd.f32 0.0, %v388
        %v390 = vpop.f32.mrf.mxu0
        %391 = vmatprep.mubr.f32.mxu0 0.0
        %392 = vmatmul.mubr.f32.gmra.mxu0 %v283
        %v393 = vpop.f32.mrf.mxu0
        %v394 = vadd.f32 0.0, %v393
        %v395 = vpop.f32.mrf.mxu0
        %396 = vmatprep.mubr.f32.mxu0 0.0
        %397 = vmatmul.mubr.f32.gmra.mxu0 %v284
        %v398 = vpop.f32.mrf.mxu0
        %v399 = vadd.f32 0.0, %v398
        %v400 = vpop.f32.mrf.mxu0
        %401 = vmatprep.mubr.f32.mxu0 0.0
        %402 = vmatmul.mubr.f32.gmra.mxu0 %v285
        %v403 = vpop.f32.mrf.mxu0
        %v404 = vadd.f32 0.0, %v403
        %v405 = vpop.f32.mrf.mxu0
        %406 = vmatprep.mubr.f32.mxu0 0.0
        %407 = vmatmul.mubr.f32.gmra.mxu0 %v286
        %v408 = vpop.f32.mrf.mxu0
        %v409 = vadd.f32 0.0, %v408
        %v410 = vpop.f32.mrf.mxu0
        %411 = vmatprep.mubr.f32.mxu0 0.0
        %412 = vmatmul.mubr.f32.gmra.mxu0 %v287
        %v413 = vpop.f32.mrf.mxu0
        %v414 = vadd.f32 0.0, %v413
        %v415 = vpop.f32.mrf.mxu0
        %416 = vmatprep.mubr.f32.mxu0 0.0
        %417 = vmatmul.mubr.f32.gmra.mxu0 %v288
        %v418 = vpop.f32.mrf.mxu0
        %v419 = vadd.f32 0.0, %v418
        %v420 = vpop.f32.mrf.mxu0
        %421 = vmatprep.mubr.f32.mxu0 0.0
        %422 = vmatmul.mubr.f32.gmra.mxu0 %v289
        %v423 = vpop.f32.mrf.mxu0
        %v424 = vadd.f32 0.0, %v423
        %v425 = vpop.f32.mrf.mxu0
        %426 = vmatprep.mubr.f32.mxu0 0.0
        %427 = vmatmul.mubr.f32.gmra.mxu0 %v290
        %v428 = vpop.f32.mrf.mxu0
        %v429 = vadd.f32 0.0, %v428
        %v430 = vpop.f32.mrf.mxu0
        %431 = vmatprep.mubr.f32.mxu0 0.0
        %432 = vmatmul.mubr.f32.gmra.mxu0 %v291
        %v433 = vpop.f32.mrf.mxu0
        %v434 = vadd.f32 0.0, %v433
        %v435 = vpop.f32.mrf.mxu0
        %436 = vmatprep.mubr.f32.mxu0 0.0
        %437 = vmatmul.mubr.f32.gmra.mxu0 %v292
        %v438 = vpop.f32.mrf.mxu0
        %v439 = vadd.f32 0.0, %v438
        %v440 = vpop.f32.mrf.mxu0
        %441 = vmatprep.mubr.f32.mxu0 0.0
        %442 = vmatmul.mubr.f32.gmra.mxu0 %v293
        %v443 = vpop.f32.mrf.mxu0
        %v444 = vadd.f32 0.0, %v443
        %v445 = vpop.f32.mrf.mxu0
        %446 = vmatprep.mubr.f32.mxu0 0.0
        %447 = vmatmul.mubr.f32.gmra.mxu0 %v294
        %v448 = vpop.f32.mrf.mxu0
        %v449 = vadd.f32 0.0, %v448
        %v450 = vpop.f32.mrf.mxu0
        %451 = vmatprep.mubr.f32.mxu0 0.0
        %452 = vmatmul.mubr.f32.gmra.mxu0 %v295
        %v453 = vpop.f32.mrf.mxu0
        %v454 = vadd.f32 0.0, %v453
        %v455 = vpop.f32.mrf.mxu0
        %456 = vdwg.mxu0
        %v457 = vadd.f32 %v264, %v379
        %v458 = vadd.f32 %v265, %v384
        %v459 = vadd.f32 %v266, %v389
        %v460 = vadd.f32 %v267, %v394
        %v461 = vadd.f32 %v268, %v399
        %v462 = vadd.f32 %v269, %v404
        %v463 = vadd.f32 %v270, %v409
        %v464 = vadd.f32 %v271, %v414
        %v465 = vadd.f32 %v272, %v419
        %v466 = vadd.f32 %v273, %v424
        %v467 = vadd.f32 %v274, %v429
        %v468 = vadd.f32 %v275, %v434
        %v469 = vadd.f32 %v276, %v439
        %v470 = vadd.f32 %v277, %v444
        %v471 = vadd.f32 %v278, %v449
        %v472 = vadd.f32 %v279, %v454
        %vm473 = vcmask 588800
        %474 = vst.msk [vmem:[#allocation2] sm:$0xff] %vm473, %v457
        %475 = vst.msk [vmem:[#allocation2 + $0x8] sm:$0xff] %vm473, %v458
        %476 = vst.msk [vmem:[#allocation2 + $0x10] sm:$0xff] %vm473, %v459
        %477 = vst.msk [vmem:[#allocation2 + $0x18] sm:$0xff] %vm473, %v460
        %478 = vst.msk [vmem:[#allocation2 + $0x20] sm:$0xff] %vm473, %v461
        %479 = vst.msk [vmem:[#allocation2 + $0x28] sm:$0xff] %vm473, %v462
        %480 = vst.msk [vmem:[#allocation2 + $0x30] sm:$0xff] %vm473, %v463
        %481 = vst.msk [vmem:[#allocation2 + $0x38] sm:$0xff] %vm473, %v464
        %482 = vst.msk [vmem:[#allocation2 + $0x40] sm:$0xff] %vm473, %v465
        %483 = vst.msk [vmem:[#allocation2 + $0x48] sm:$0xff] %vm473, %v466
        %484 = vst.msk [vmem:[#allocation2 + $0x50] sm:$0xff] %vm473, %v467
        %485 = vst.msk [vmem:[#allocation2 + $0x58] sm:$0xff] %vm473, %v468
        %486 = vst.msk [vmem:[#allocation2 + $0x60] sm:$0xff] %vm473, %v469
        %487 = vst.msk [vmem:[#allocation2 + $0x68] sm:$0xff] %vm473, %v470
        %488 = vst.msk [vmem:[#allocation2 + $0x70] sm:$0xff] %vm473, %v471
        %489 = vst.msk [vmem:[#allocation2 + $0x78] sm:$0xff] %vm473, %v472
        %p490 = scmp.eq.s32.totalorder %s23, 1
        // Predicated region
        $region45: #{tpu_custom_call.1} parent=31 // pred_check
          %p491 = pneg %p490
        $region46: #{tpu_custom_call.1} parent=31 // pred_check_branch
          %493 = sbr.rel (%p491) target = $region48
        $region47: #{tpu_custom_call.1} parent=31 // pred_region
          %v494 = vld [vmem:[#allocation2] sm:$0xff]
          %v495 = vld [vmem:[#allocation2 + $0x8] sm:$0xff]
          %v496 = vld [vmem:[#allocation2 + $0x10] sm:$0xff]
          %v497 = vld [vmem:[#allocation2 + $0x18] sm:$0xff]
          %v498 = vld [vmem:[#allocation2 + $0x20] sm:$0xff]
          %v499 = vld [vmem:[#allocation2 + $0x28] sm:$0xff]
          %v500 = vld [vmem:[#allocation2 + $0x30] sm:$0xff]
          %v501 = vld [vmem:[#allocation2 + $0x38] sm:$0xff]
          %v502 = vld [vmem:[#allocation2 + $0x40] sm:$0xff]
          %v503 = vld [vmem:[#allocation2 + $0x48] sm:$0xff]
          %v504 = vld [vmem:[#allocation2 + $0x50] sm:$0xff]
          %v505 = vld [vmem:[#allocation2 + $0x58] sm:$0xff]
          %v506 = vld [vmem:[#allocation2 + $0x60] sm:$0xff]
          %v507 = vld [vmem:[#allocation2 + $0x68] sm:$0xff]
          %v508 = vld [vmem:[#allocation2 + $0x70] sm:$0xff]
          %v509 = vld [vmem:[#allocation2 + $0x78] sm:$0xff]
          %v510 = vlaneseq
          %v511 = vand.u32 %v510, 127
          %v512 = vld [vmem:[#allocation5] sm:$0xff]
          %v513 = vld [vmem:[#allocation5 + $0x8] sm:$0xff]
          %v514 = vld [vmem:[#allocation5 + $0x10] sm:$0xff]
          %v515 = vld [vmem:[#allocation5 + $0x18] sm:$0xff]
          %v516 = vld [vmem:[#allocation5 + $0x20] sm:$0xff]
          %v517 = vld [vmem:[#allocation5 + $0x28] sm:$0xff]
          %v518 = vld [vmem:[#allocation5 + $0x30] sm:$0xff]
          %v519 = vld [vmem:[#allocation5 + $0x38] sm:$0xff]
          %v520 = vld [vmem:[#allocation5 + $0x40] sm:$0xff]
          %v521 = vld [vmem:[#allocation5 + $0x48] sm:$0xff]
          %v522 = vld [vmem:[#allocation5 + $0x50] sm:$0xff]
          %v523 = vld [vmem:[#allocation5 + $0x58] sm:$0xff]
          %v524 = vld [vmem:[#allocation5 + $0x60] sm:$0xff]
          %v525 = vld [vmem:[#allocation5 + $0x68] sm:$0xff]
          %v526 = vld [vmem:[#allocation5 + $0x70] sm:$0xff]
          %v527 = vld [vmem:[#allocation5 + $0x78] sm:$0xff]
          %528 = vmatprep.subr.mxu0 0.0
          %529 = vmatpush1.msra.mxu0 %v509
          %530 = vmatprep.subr.mxu0 0.0
          %531 = vmatpush1.msra.mxu0 %v508
          %532 = vmatprep.subr.mxu0 0.0
          %533 = vmatpush1.msra.mxu0 %v507
          %534 = vmatprep.subr.mxu0 0.0
          %535 = vmatpush1.msra.mxu0 %v506
          %536 = vmatprep.subr.mxu0 0.0
          %537 = vmatpush1.msra.mxu0 %v505
          %538 = vmatprep.subr.mxu0 0.0
          %539 = vmatpush1.msra.mxu0 %v504
          %540 = vmatprep.subr.mxu0 0.0
          %541 = vmatpush1.msra.mxu0 %v503
          %542 = vmatprep.subr.mxu0 0.0
          %543 = vmatpush1.msra.mxu0 %v502
          %544 = vmatprep.subr.mxu0 0.0
          %545 = vmatpush1.msra.mxu0 %v501
          %546 = vmatprep.subr.mxu0 0.0
          %547 = vmatpush1.msra.mxu0 %v500
          %548 = vmatprep.subr.mxu0 0.0
          %549 = vmatpush1.msra.mxu0 %v499
          %550 = vmatprep.subr.mxu0 0.0
          %551 = vmatpush1.msra.mxu0 %v498
          %552 = vmatprep.subr.mxu0 0.0
          %553 = vmatpush1.msra.mxu0 %v497
          %554 = vmatprep.subr.mxu0 0.0
          %555 = vmatpush1.msra.mxu0 %v496
          %556 = vmatprep.subr.mxu0 0.0
          %557 = vmatpush1.msra.mxu0 %v495
          %558 = vmatprep.subr.mxu0 0.0
          %559 = vmatpush1.msra.mxu0 %v494
          %560 = vmatprep.subr.mxu0 0.0
          %561 = vmatpush2.msra.mxu0 0.0
          %562 = vmatprep.subr.mxu0 0.0
          %563 = vmatpush2.msra.mxu0 0.0
          %564 = vmatprep.subr.mxu0 0.0
          %565 = vmatpush2.msra.mxu0 0.0
          %566 = vmatprep.subr.mxu0 0.0
          %567 = vmatpush2.msra.mxu0 0.0
          %568 = vmatprep.subr.mxu0 0.0
          %569 = vmatpush2.msra.mxu0 0.0
          %570 = vmatprep.subr.mxu0 0.0
          %571 = vmatpush2.msra.mxu0 0.0
          %572 = vmatprep.subr.mxu0 0.0
          %573 = vmatpush2.msra.mxu0 0.0
          %574 = vmatprep.subr.mxu0 0.0
          %575 = vmatpush2.msra.mxu0 0.0
          %576 = vmatprep.subr.mxu0 0.0
          %577 = vmatpush2.msra.mxu0 0.0
          %578 = vmatprep.subr.mxu0 0.0
          %579 = vmatpush2.msra.mxu0 0.0
          %580 = vmatprep.subr.mxu0 0.0
          %581 = vmatpush2.msra.mxu0 0.0
          %582 = vmatprep.subr.mxu0 0.0
          %583 = vmatpush2.msra.mxu0 0.0
          %584 = vmatprep.subr.mxu0 0.0
          %585 = vmatpush2.msra.mxu0 0.0
          %586 = vmatprep.subr.mxu0 0.0
          %587 = vmatpush2.msra.mxu0 0.0
          %588 = vmatprep.subr.mxu0 0.0
          %589 = vmatpush2.msra.mxu0 0.0
          %590 = vmatprep.subr.mxu0 0.0
          %591 = vmatpush2.msra.mxu0 0.0
          %592 = vmatprep.mubr.f32.mxu0 0.0
          %593 = vmatmul.mubr.f32.gmra.mxu0 %v512
          %v594 = vpop.f32.mrf.mxu0
          %v595 = vadd.f32 0.0, %v594
          %v596 = vpop.f32.mrf.mxu0
          %597 = vmatprep.mubr.f32.mxu0 0.0
          %598 = vmatmul.mubr.f32.gmra.mxu0 %v513
          %v599 = vpop.f32.mrf.mxu0
          %v600 = vadd.f32 0.0, %v599
          %v601 = vpop.f32.mrf.mxu0
          %602 = vmatprep.mubr.f32.mxu0 0.0
          %603 = vmatmul.mubr.f32.gmra.mxu0 %v514
          %v604 = vpop.f32.mrf.mxu0
          %v605 = vadd.f32 0.0, %v604
          %v606 = vpop.f32.mrf.mxu0
          %607 = vmatprep.mubr.f32.mxu0 0.0
          %608 = vmatmul.mubr.f32.gmra.mxu0 %v515
          %v609 = vpop.f32.mrf.mxu0
          %v610 = vadd.f32 0.0, %v609
          %v611 = vpop.f32.mrf.mxu0
          %612 = vmatprep.mubr.f32.mxu0 0.0
          %613 = vmatmul.mubr.f32.gmra.mxu0 %v516
          %v614 = vpop.f32.mrf.mxu0
          %v615 = vadd.f32 0.0, %v614
          %v616 = vpop.f32.mrf.mxu0
          %617 = vmatprep.mubr.f32.mxu0 0.0
          %618 = vmatmul.mubr.f32.gmra.mxu0 %v517
          %v619 = vpop.f32.mrf.mxu0
          %v620 = vadd.f32 0.0, %v619
          %v621 = vpop.f32.mrf.mxu0
          %622 = vmatprep.mubr.f32.mxu0 0.0
          %623 = vmatmul.mubr.f32.gmra.mxu0 %v518
          %v624 = vpop.f32.mrf.mxu0
          %v625 = vadd.f32 0.0, %v624
          %v626 = vpop.f32.mrf.mxu0
          %627 = vmatprep.mubr.f32.mxu0 0.0
          %628 = vmatmul.mubr.f32.gmra.mxu0 %v519
          %v629 = vpop.f32.mrf.mxu0
          %v630 = vadd.f32 0.0, %v629
          %v631 = vpop.f32.mrf.mxu0
          %632 = vmatprep.mubr.f32.mxu0 0.0
          %633 = vmatmul.mubr.f32.gmra.mxu0 %v520
          %v634 = vpop.f32.mrf.mxu0
          %v635 = vadd.f32 0.0, %v634
          %v636 = vpop.f32.mrf.mxu0
          %637 = vmatprep.mubr.f32.mxu0 0.0
          %638 = vmatmul.mubr.f32.gmra.mxu0 %v521
          %v639 = vpop.f32.mrf.mxu0
          %v640 = vadd.f32 0.0, %v639
          %v641 = vpop.f32.mrf.mxu0
          %642 = vmatprep.mubr.f32.mxu0 0.0
          %643 = vmatmul.mubr.f32.gmra.mxu0 %v522
          %v644 = vpop.f32.mrf.mxu0
          %v645 = vadd.f32 0.0, %v644
          %v646 = vpop.f32.mrf.mxu0
          %647 = vmatprep.mubr.f32.mxu0 0.0
          %648 = vmatmul.mubr.f32.gmra.mxu0 %v523
          %v649 = vpop.f32.mrf.mxu0
          %v650 = vadd.f32 0.0, %v649
          %v651 = vpop.f32.mrf.mxu0
          %652 = vmatprep.mubr.f32.mxu0 0.0
          %653 = vmatmul.mubr.f32.gmra.mxu0 %v524
          %v654 = vpop.f32.mrf.mxu0
          %v655 = vadd.f32 0.0, %v654
          %v656 = vpop.f32.mrf.mxu0
          %657 = vmatprep.mubr.f32.mxu0 0.0
          %658 = vmatmul.mubr.f32.gmra.mxu0 %v525
          %v659 = vpop.f32.mrf.mxu0
          %v660 = vadd.f32 0.0, %v659
          %v661 = vpop.f32.mrf.mxu0
          %662 = vmatprep.mubr.f32.mxu0 0.0
          %663 = vmatmul.mubr.f32.gmra.mxu0 %v526
          %v664 = vpop.f32.mrf.mxu0
          %v665 = vadd.f32 0.0, %v664
          %v666 = vpop.f32.mrf.mxu0
          %667 = vmatprep.mubr.f32.mxu0 0.0
          %668 = vmatmul.mubr.f32.gmra.mxu0 %v527
          %v669 = vpop.f32.mrf.mxu0
          %v670 = vadd.f32 0.0, %v669
          %v671 = vpop.f32.mrf.mxu0
          %672 = vdwg.mxu0
          %vm673 = vcmp.ge.s32.totalorder %v511, 0
          %vm674 = vcmp.lt.s32.totalorder %v511, 8
          %vm675 = vmand %vm673, %vm674
          %v676 = vsel %vm675, 1, 0
          %vm677 = vcmp.eq.s32.totalorder %v676, 1
          %v678 = vsel %vm677, %v595, 0.0
          %v679 = vsel %vm677, %v600, 0.0
          %v680 = vsel %vm677, %v605, 0.0
          %v681 = vsel %vm677, %v610, 0.0
          %v682 = vsel %vm677, %v615, 0.0
          %v683 = vsel %vm677, %v620, 0.0
          %v684 = vsel %vm677, %v625, 0.0
          %v685 = vsel %vm677, %v630, 0.0
          %v686 = vsel %vm677, %v635, 0.0
          %v687 = vsel %vm677, %v640, 0.0
          %v688 = vsel %vm677, %v645, 0.0
          %v689 = vsel %vm677, %v650, 0.0
          %v690 = vsel %vm677, %v655, 0.0
          %v691 = vsel %vm677, %v660, 0.0
          %v692 = vsel %vm677, %v665, 0.0
          %v693 = vsel %vm677, %v670, 0.0
          %s694 = scalar_lea.vmem [#allocation5], 128
          %v695 = vld [vmem:[%s694] sm:$0xff]
          %v696 = vld [vmem:[%s694 + $0x8] sm:$0xff]
          %v697 = vld [vmem:[%s694 + $0x10] sm:$0xff]
          %v698 = vld [vmem:[%s694 + $0x18] sm:$0xff]
          %v699 = vld [vmem:[%s694 + $0x20] sm:$0xff]
          %v700 = vld [vmem:[%s694 + $0x28] sm:$0xff]
          %v701 = vld [vmem:[%s694 + $0x30] sm:$0xff]
          %v702 = vld [vmem:[%s694 + $0x38] sm:$0xff]
          %v703 = vld [vmem:[%s694 + $0x40] sm:$0xff]
          %v704 = vld [vmem:[%s694 + $0x48] sm:$0xff]
          %v705 = vld [vmem:[%s694 + $0x50] sm:$0xff]
          %v706 = vld [vmem:[%s694 + $0x58] sm:$0xff]
          %v707 = vld [vmem:[%s694 + $0x60] sm:$0xff]
          %v708 = vld [vmem:[%s694 + $0x68] sm:$0xff]
          %v709 = vld [vmem:[%s694 + $0x70] sm:$0xff]
          %v710 = vld [vmem:[%s694 + $0x78] sm:$0xff]
          %711 = vmatprep.subr.mxu0 0.0
          %712 = vmatpush1.msra.mxu0 %v509
          %713 = vmatprep.subr.mxu0 0.0
          %714 = vmatpush1.msra.mxu0 %v508
          %715 = vmatprep.subr.mxu0 0.0
          %716 = vmatpush1.msra.mxu0 %v507
          %717 = vmatprep.subr.mxu0 0.0
          %718 = vmatpush1.msra.mxu0 %v506
          %719 = vmatprep.subr.mxu0 0.0
          %720 = vmatpush1.msra.mxu0 %v505
          %721 = vmatprep.subr.mxu0 0.0
          %722 = vmatpush1.msra.mxu0 %v504
          %723 = vmatprep.subr.mxu0 0.0
          %724 = vmatpush1.msra.mxu0 %v503
          %725 = vmatprep.subr.mxu0 0.0
          %726 = vmatpush1.msra.mxu0 %v502
          %727 = vmatprep.subr.mxu0 0.0
          %728 = vmatpush1.msra.mxu0 %v501
          %729 = vmatprep.subr.mxu0 0.0
          %730 = vmatpush1.msra.mxu0 %v500
          %731 = vmatprep.subr.mxu0 0.0
          %732 = vmatpush1.msra.mxu0 %v499
          %733 = vmatprep.subr.mxu0 0.0
          %734 = vmatpush1.msra.mxu0 %v498
          %735 = vmatprep.subr.mxu0 0.0
          %736 = vmatpush1.msra.mxu0 %v497
          %737 = vmatprep.subr.mxu0 0.0
          %738 = vmatpush1.msra.mxu0 %v496
          %739 = vmatprep.subr.mxu0 0.0
          %740 = vmatpush1.msra.mxu0 %v495
          %741 = vmatprep.subr.mxu0 0.0
          %742 = vmatpush1.msra.mxu0 %v494
          %743 = vmatprep.subr.mxu0 0.0
          %744 = vmatpush2.msra.mxu0 0.0
          %745 = vmatprep.subr.mxu0 0.0
          %746 = vmatpush2.msra.mxu0 0.0
          %747 = vmatprep.subr.mxu0 0.0
          %748 = vmatpush2.msra.mxu0 0.0
          %749 = vmatprep.subr.mxu0 0.0
          %750 = vmatpush2.msra.mxu0 0.0
          %751 = vmatprep.subr.mxu0 0.0
          %752 = vmatpush2.msra.mxu0 0.0
          %753 = vmatprep.subr.mxu0 0.0
          %754 = vmatpush2.msra.mxu0 0.0
          %755 = vmatprep.subr.mxu0 0.0
          %756 = vmatpush2.msra.mxu0 0.0
          %757 = vmatprep.subr.mxu0 0.0
          %758 = vmatpush2.msra.mxu0 0.0
          %759 = vmatprep.subr.mxu0 0.0
          %760 = vmatpush2.msra.mxu0 0.0
          %761 = vmatprep.subr.mxu0 0.0
          %762 = vmatpush2.msra.mxu0 0.0
          %763 = vmatprep.subr.mxu0 0.0
          %764 = vmatpush2.msra.mxu0 0.0
          %765 = vmatprep.subr.mxu0 0.0
          %766 = vmatpush2.msra.mxu0 0.0
          %767 = vmatprep.subr.mxu0 0.0
          %768 = vmatpush2.msra.mxu0 0.0
          %769 = vmatprep.subr.mxu0 0.0
          %770 = vmatpush2.msra.mxu0 0.0
          %771 = vmatprep.subr.mxu0 0.0
          %772 = vmatpush2.msra.mxu0 0.0
          %773 = vmatprep.subr.mxu0 0.0
          %774 = vmatpush2.msra.mxu0 0.0
          %775 = vmatprep.mubr.f32.mxu0 0.0
          %776 = vmatmul.mubr.f32.gmra.mxu0 %v695
          %v777 = vpop.f32.mrf.mxu0
          %v778 = vadd.f32 0.0, %v777
          %v779 = vpop.f32.mrf.mxu0
          %780 = vmatprep.mubr.f32.mxu0 0.0
          %781 = vmatmul.mubr.f32.gmra.mxu0 %v696
          %v782 = vpop.f32.mrf.mxu0
          %v783 = vadd.f32 0.0, %v782
          %v784 = vpop.f32.mrf.mxu0
          %785 = vmatprep.mubr.f32.mxu0 0.0
          %786 = vmatmul.mubr.f32.gmra.mxu0 %v697
          %v787 = vpop.f32.mrf.mxu0
          %v788 = vadd.f32 0.0, %v787
          %v789 = vpop.f32.mrf.mxu0
          %790 = vmatprep.mubr.f32.mxu0 0.0
          %791 = vmatmul.mubr.f32.gmra.mxu0 %v698
          %v792 = vpop.f32.mrf.mxu0
          %v793 = vadd.f32 0.0, %v792
          %v794 = vpop.f32.mrf.mxu0
          %795 = vmatprep.mubr.f32.mxu0 0.0
          %796 = vmatmul.mubr.f32.gmra.mxu0 %v699
          %v797 = vpop.f32.mrf.mxu0
          %v798 = vadd.f32 0.0, %v797
          %v799 = vpop.f32.mrf.mxu0
          %800 = vmatprep.mubr.f32.mxu0 0.0
          %801 = vmatmul.mubr.f32.gmra.mxu0 %v700
          %v802 = vpop.f32.mrf.mxu0
          %v803 = vadd.f32 0.0, %v802
          %v804 = vpop.f32.mrf.mxu0
          %805 = vmatprep.mubr.f32.mxu0 0.0
          %806 = vmatmul.mubr.f32.gmra.mxu0 %v701
          %v807 = vpop.f32.mrf.mxu0
          %v808 = vadd.f32 0.0, %v807
          %v809 = vpop.f32.mrf.mxu0
          %810 = vmatprep.mubr.f32.mxu0 0.0
          %811 = vmatmul.mubr.f32.gmra.mxu0 %v702
          %v812 = vpop.f32.mrf.mxu0
          %v813 = vadd.f32 0.0, %v812
          %v814 = vpop.f32.mrf.mxu0
          %815 = vmatprep.mubr.f32.mxu0 0.0
          %816 = vmatmul.mubr.f32.gmra.mxu0 %v703
          %v817 = vpop.f32.mrf.mxu0
          %v818 = vadd.f32 0.0, %v817
          %v819 = vpop.f32.mrf.mxu0
          %820 = vmatprep.mubr.f32.mxu0 0.0
          %821 = vmatmul.mubr.f32.gmra.mxu0 %v704
          %v822 = vpop.f32.mrf.mxu0
          %v823 = vadd.f32 0.0, %v822
          %v824 = vpop.f32.mrf.mxu0
          %825 = vmatprep.mubr.f32.mxu0 0.0
          %826 = vmatmul.mubr.f32.gmra.mxu0 %v705
          %v827 = vpop.f32.mrf.mxu0
          %v828 = vadd.f32 0.0, %v827
          %v829 = vpop.f32.mrf.mxu0
          %830 = vmatprep.mubr.f32.mxu0 0.0
          %831 = vmatmul.mubr.f32.gmra.mxu0 %v706
          %v832 = vpop.f32.mrf.mxu0
          %v833 = vadd.f32 0.0, %v832
          %v834 = vpop.f32.mrf.mxu0
          %835 = vmatprep.mubr.f32.mxu0 0.0
          %836 = vmatmul.mubr.f32.gmra.mxu0 %v707
          %v837 = vpop.f32.mrf.mxu0
          %v838 = vadd.f32 0.0, %v837
          %v839 = vpop.f32.mrf.mxu0
          %840 = vmatprep.mubr.f32.mxu0 0.0
          %841 = vmatmul.mubr.f32.gmra.mxu0 %v708
          %v842 = vpop.f32.mrf.mxu0
          %v843 = vadd.f32 0.0, %v842
          %v844 = vpop.f32.mrf.mxu0
          %845 = vmatprep.mubr.f32.mxu0 0.0
          %846 = vmatmul.mubr.f32.gmra.mxu0 %v709
          %v847 = vpop.f32.mrf.mxu0
          %v848 = vadd.f32 0.0, %v847
          %v849 = vpop.f32.mrf.mxu0
          %850 = vmatprep.mubr.f32.mxu0 0.0
          %851 = vmatmul.mubr.f32.gmra.mxu0 %v710
          %v852 = vpop.f32.mrf.mxu0
          %v853 = vadd.f32 0.0, %v852
          %v854 = vpop.f32.mrf.mxu0
          %855 = vdwg.mxu0
          %vm856 = vcmp.ge.s32.totalorder %v511, 8
          %vm857 = vcmp.lt.s32.totalorder %v511, 16
          %vm858 = vmand %vm856, %vm857
          %v859 = vsel %vm858, 1, 0
          %vm860 = vcmp.eq.s32.totalorder %v859, 1
          %v861 = vsel %vm860, %v778, %v678
          %v862 = vsel %vm860, %v783, %v679
          %v863 = vsel %vm860, %v788, %v680
          %v864 = vsel %vm860, %v793, %v681
          %v865 = vsel %vm860, %v798, %v682
          %v866 = vsel %vm860, %v803, %v683
          %v867 = vsel %vm860, %v808, %v684
          %v868 = vsel %vm860, %v813, %v685
          %v869 = vsel %vm860, %v818, %v686
          %v870 = vsel %vm860, %v823, %v687
          %v871 = vsel %vm860, %v828, %v688
          %v872 = vsel %vm860, %v833, %v689
          %v873 = vsel %vm860, %v838, %v690
          %v874 = vsel %vm860, %v843, %v691
          %v875 = vsel %vm860, %v848, %v692
          %v876 = vsel %vm860, %v853, %v693
          %s877 = scalar_lea.vmem [#allocation5], 256
          %v878 = vld [vmem:[%s877] sm:$0xff]
          %v879 = vld [vmem:[%s877 + $0x8] sm:$0xff]
          %v880 = vld [vmem:[%s877 + $0x10] sm:$0xff]
          %v881 = vld [vmem:[%s877 + $0x18] sm:$0xff]
          %v882 = vld [vmem:[%s877 + $0x20] sm:$0xff]
          %v883 = vld [vmem:[%s877 + $0x28] sm:$0xff]
          %v884 = vld [vmem:[%s877 + $0x30] sm:$0xff]
          %v885 = vld [vmem:[%s877 + $0x38] sm:$0xff]
          %v886 = vld [vmem:[%s877 + $0x40] sm:$0xff]
          %v887 = vld [vmem:[%s877 + $0x48] sm:$0xff]
          %v888 = vld [vmem:[%s877 + $0x50] sm:$0xff]
          %v889 = vld [vmem:[%s877 + $0x58] sm:$0xff]
          %v890 = vld [vmem:[%s877 + $0x60] sm:$0xff]
          %v891 = vld [vmem:[%s877 + $0x68] sm:$0xff]
          %v892 = vld [vmem:[%s877 + $0x70] sm:$0xff]
          %v893 = vld [vmem:[%s877 + $0x78] sm:$0xff]
          %894 = vmatprep.subr.mxu0 0.0
          %895 = vmatpush1.msra.mxu0 %v509
          %896 = vmatprep.subr.mxu0 0.0
          %897 = vmatpush1.msra.mxu0 %v508
          %898 = vmatprep.subr.mxu0 0.0
          %899 = vmatpush1.msra.mxu0 %v507
          %900 = vmatprep.subr.mxu0 0.0
          %901 = vmatpush1.msra.mxu0 %v506
          %902 = vmatprep.subr.mxu0 0.0
          %903 = vmatpush1.msra.mxu0 %v505
          %904 = vmatprep.subr.mxu0 0.0
          %905 = vmatpush1.msra.mxu0 %v504
          %906 = vmatprep.subr.mxu0 0.0
          %907 = vmatpush1.msra.mxu0 %v503
          %908 = vmatprep.subr.mxu0 0.0
          %909 = vmatpush1.msra.mxu0 %v502
          %910 = vmatprep.subr.mxu0 0.0
          %911 = vmatpush1.msra.mxu0 %v501
          %912 = vmatprep.subr.mxu0 0.0
          %913 = vmatpush1.msra.mxu0 %v500
          %914 = vmatprep.subr.mxu0 0.0
          %915 = vmatpush1.msra.mxu0 %v499
          %916 = vmatprep.subr.mxu0 0.0
          %917 = vmatpush1.msra.mxu0 %v498
          %918 = vmatprep.subr.mxu0 0.0
          %919 = vmatpush1.msra.mxu0 %v497
          %920 = vmatprep.subr.mxu0 0.0
          %921 = vmatpush1.msra.mxu0 %v496
          %922 = vmatprep.subr.mxu0 0.0
          %923 = vmatpush1.msra.mxu0 %v495
          %924 = vmatprep.subr.mxu0 0.0
          %925 = vmatpush1.msra.mxu0 %v494
          %926 = vmatprep.subr.mxu0 0.0
          %927 = vmatpush2.msra.mxu0 0.0
          %928 = vmatprep.subr.mxu0 0.0
          %929 = vmatpush2.msra.mxu0 0.0
          %930 = vmatprep.subr.mxu0 0.0
          %931 = vmatpush2.msra.mxu0 0.0
          %932 = vmatprep.subr.mxu0 0.0
          %933 = vmatpush2.msra.mxu0 0.0
          %934 = vmatprep.subr.mxu0 0.0
          %935 = vmatpush2.msra.mxu0 0.0
          %936 = vmatprep.subr.mxu0 0.0
          %937 = vmatpush2.msra.mxu0 0.0
          %938 = vmatprep.subr.mxu0 0.0
          %939 = vmatpush2.msra.mxu0 0.0
          %940 = vmatprep.subr.mxu0 0.0
          %941 = vmatpush2.msra.mxu0 0.0
          %942 = vmatprep.subr.mxu0 0.0
          %943 = vmatpush2.msra.mxu0 0.0
          %944 = vmatprep.subr.mxu0 0.0
          %945 = vmatpush2.msra.mxu0 0.0
          %946 = vmatprep.subr.mxu0 0.0
          %947 = vmatpush2.msra.mxu0 0.0
          %948 = vmatprep.subr.mxu0 0.0
          %949 = vmatpush2.msra.mxu0 0.0
          %950 = vmatprep.subr.mxu0 0.0
          %951 = vmatpush2.msra.mxu0 0.0
          %952 = vmatprep.subr.mxu0 0.0
          %953 = vmatpush2.msra.mxu0 0.0
          %954 = vmatprep.subr.mxu0 0.0
          %955 = vmatpush2.msra.mxu0 0.0
          %956 = vmatprep.subr.mxu0 0.0
          %957 = vmatpush2.msra.mxu0 0.0
          %958 = vmatprep.mubr.f32.mxu0 0.0
          %959 = vmatmul.mubr.f32.gmra.mxu0 %v878
          %v960 = vpop.f32.mrf.mxu0
          %v961 = vadd.f32 0.0, %v960
          %v962 = vpop.f32.mrf.mxu0
          %963 = vmatprep.mubr.f32.mxu0 0.0
          %964 = vmatmul.mubr.f32.gmra.mxu0 %v879
          %v965 = vpop.f32.mrf.mxu0
          %v966 = vadd.f32 0.0, %v965
          %v967 = vpop.f32.mrf.mxu0
          %968 = vmatprep.mubr.f32.mxu0 0.0
          %969 = vmatmul.mubr.f32.gmra.mxu0 %v880
          %v970 = vpop.f32.mrf.mxu0
          %v971 = vadd.f32 0.0, %v970
          %v972 = vpop.f32.mrf.mxu0
          %973 = vmatprep.mubr.f32.mxu0 0.0
          %974 = vmatmul.mubr.f32.gmra.mxu0 %v881
          %v975 = vpop.f32.mrf.mxu0
          %v976 = vadd.f32 0.0, %v975
          %v977 = vpop.f32.mrf.mxu0
          %978 = vmatprep.mubr.f32.mxu0 0.0
          %979 = vmatmul.mubr.f32.gmra.mxu0 %v882
          %v980 = vpop.f32.mrf.mxu0
          %v981 = vadd.f32 0.0, %v980
          %v982 = vpop.f32.mrf.mxu0
          %983 = vmatprep.mubr.f32.mxu0 0.0
          %984 = vmatmul.mubr.f32.gmra.mxu0 %v883
          %v985 = vpop.f32.mrf.mxu0
          %v986 = vadd.f32 0.0, %v985
          %v987 = vpop.f32.mrf.mxu0
          %988 = vmatprep.mubr.f32.mxu0 0.0
          %989 = vmatmul.mubr.f32.gmra.mxu0 %v884
          %v990 = vpop.f32.mrf.mxu0
          %v991 = vadd.f32 0.0, %v990
          %v992 = vpop.f32.mrf.mxu0
          %993 = vmatprep.mubr.f32.mxu0 0.0
          %994 = vmatmul.mubr.f32.gmra.mxu0 %v885
          %v995 = vpop.f32.mrf.mxu0
          %v996 = vadd.f32 0.0, %v995
          %v997 = vpop.f32.mrf.mxu0
          %998 = vmatprep.mubr.f32.mxu0 0.0
          %999 = vmatmul.mubr.f32.gmra.mxu0 %v886
          %v1000 = vpop.f32.mrf.mxu0
          %v1001 = vadd.f32 0.0, %v1000
          %v1002 = vpop.f32.mrf.mxu0
          %1003 = vmatprep.mubr.f32.mxu0 0.0
          %1004 = vmatmul.mubr.f32.gmra.mxu0 %v887
          %v1005 = vpop.f32.mrf.mxu0
          %v1006 = vadd.f32 0.0, %v1005
          %v1007 = vpop.f32.mrf.mxu0
          %1008 = vmatprep.mubr.f32.mxu0 0.0
          %1009 = vmatmul.mubr.f32.gmra.mxu0 %v888
          %v1010 = vpop.f32.mrf.mxu0
          %v1011 = vadd.f32 0.0, %v1010
          %v1012 = vpop.f32.mrf.mxu0
          %1013 = vmatprep.mubr.f32.mxu0 0.0
          %1014 = vmatmul.mubr.f32.gmra.mxu0 %v889
          %v1015 = vpop.f32.mrf.mxu0
          %v1016 = vadd.f32 0.0, %v1015
          %v1017 = vpop.f32.mrf.mxu0
          %1018 = vmatprep.mubr.f32.mxu0 0.0
          %1019 = vmatmul.mubr.f32.gmra.mxu0 %v890
          %v1020 = vpop.f32.mrf.mxu0
          %v1021 = vadd.f32 0.0, %v1020
          %v1022 = vpop.f32.mrf.mxu0
          %1023 = vmatprep.mubr.f32.mxu0 0.0
          %1024 = vmatmul.mubr.f32.gmra.mxu0 %v891
          %v1025 = vpop.f32.mrf.mxu0
          %v1026 = vadd.f32 0.0, %v1025
          %v1027 = vpop.f32.mrf.mxu0
          %1028 = vmatprep.mubr.f32.mxu0 0.0
          %1029 = vmatmul.mubr.f32.gmra.mxu0 %v892
          %v1030 = vpop.f32.mrf.mxu0
          %v1031 = vadd.f32 0.0, %v1030
          %v1032 = vpop.f32.mrf.mxu0
          %1033 = vmatprep.mubr.f32.mxu0 0.0
          %1034 = vmatmul.mubr.f32.gmra.mxu0 %v893
          %v1035 = vpop.f32.mrf.mxu0
          %v1036 = vadd.f32 0.0, %v1035
          %v1037 = vpop.f32.mrf.mxu0
          %1038 = vdwg.mxu0
          %vm1039 = vcmp.ge.s32.totalorder %v511, 16
          %vm1040 = vcmp.lt.s32.totalorder %v511, 32
          %vm1041 = vmand %vm1039, %vm1040
          %v1042 = vsel %vm1041, 1, 0
          %vm1043 = vcmp.eq.s32.totalorder %v1042, 1
          %v1044 = vsel %vm1043, %v961, %v861
          %v1045 = vsel %vm1043, %v966, %v862
          %v1046 = vsel %vm1043, %v971, %v863
          %v1047 = vsel %vm1043, %v976, %v864
          %v1048 = vsel %vm1043, %v981, %v865
          %v1049 = vsel %vm1043, %v986, %v866
          %v1050 = vsel %vm1043, %v991, %v867
          %v1051 = vsel %vm1043, %v996, %v868
          %v1052 = vsel %vm1043, %v1001, %v869
          %v1053 = vsel %vm1043, %v1006, %v870
          %v1054 = vsel %vm1043, %v1011, %v871
          %v1055 = vsel %vm1043, %v1016, %v872
          %v1056 = vsel %vm1043, %v1021, %v873
          %v1057 = vsel %vm1043, %v1026, %v874
          %v1058 = vsel %vm1043, %v1031, %v875
          %v1059 = vsel %vm1043, %v1036, %v876
          %s1060 = scalar_lea.vmem [#allocation5], 384
          %v1061 = vld [vmem:[%s1060] sm:$0xff]
          %v1062 = vld [vmem:[%s1060 + $0x8] sm:$0xff]
          %v1063 = vld [vmem:[%s1060 + $0x10] sm:$0xff]
          %v1064 = vld [vmem:[%s1060 + $0x18] sm:$0xff]
          %v1065 = vld [vmem:[%s1060 + $0x20] sm:$0xff]
          %v1066 = vld [vmem:[%s1060 + $0x28] sm:$0xff]
          %v1067 = vld [vmem:[%s1060 + $0x30] sm:$0xff]
          %v1068 = vld [vmem:[%s1060 + $0x38] sm:$0xff]
          %v1069 = vld [vmem:[%s1060 + $0x40] sm:$0xff]
          %v1070 = vld [vmem:[%s1060 + $0x48] sm:$0xff]
          %v1071 = vld [vmem:[%s1060 + $0x50] sm:$0xff]
          %v1072 = vld [vmem:[%s1060 + $0x58] sm:$0xff]
          %v1073 = vld [vmem:[%s1060 + $0x60] sm:$0xff]
          %v1074 = vld [vmem:[%s1060 + $0x68] sm:$0xff]
          %v1075 = vld [vmem:[%s1060 + $0x70] sm:$0xff]
          %v1076 = vld [vmem:[%s1060 + $0x78] sm:$0xff]
          %1077 = vmatprep.subr.mxu0 0.0
          %1078 = vmatpush1.msra.mxu0 %v509
          %1079 = vmatprep.subr.mxu0 0.0
          %1080 = vmatpush1.msra.mxu0 %v508
          %1081 = vmatprep.subr.mxu0 0.0
          %1082 = vmatpush1.msra.mxu0 %v507
          %1083 = vmatprep.subr.mxu0 0.0
          %1084 = vmatpush1.msra.mxu0 %v506
          %1085 = vmatprep.subr.mxu0 0.0
          %1086 = vmatpush1.msra.mxu0 %v505
          %1087 = vmatprep.subr.mxu0 0.0
          %1088 = vmatpush1.msra.mxu0 %v504
          %1089 = vmatprep.subr.mxu0 0.0
          %1090 = vmatpush1.msra.mxu0 %v503
          %1091 = vmatprep.subr.mxu0 0.0
          %1092 = vmatpush1.msra.mxu0 %v502
          %1093 = vmatprep.subr.mxu0 0.0
          %1094 = vmatpush1.msra.mxu0 %v501
          %1095 = vmatprep.subr.mxu0 0.0
          %1096 = vmatpush1.msra.mxu0 %v500
          %1097 = vmatprep.subr.mxu0 0.0
          %1098 = vmatpush1.msra.mxu0 %v499
          %1099 = vmatprep.subr.mxu0 0.0
          %1100 = vmatpush1.msra.mxu0 %v498
          %1101 = vmatprep.subr.mxu0 0.0
          %1102 = vmatpush1.msra.mxu0 %v497
          %1103 = vmatprep.subr.mxu0 0.0
          %1104 = vmatpush1.msra.mxu0 %v496
          %1105 = vmatprep.subr.mxu0 0.0
          %1106 = vmatpush1.msra.mxu0 %v495
          %1107 = vmatprep.subr.mxu0 0.0
          %1108 = vmatpush1.msra.mxu0 %v494
          %1109 = vmatprep.subr.mxu0 0.0
          %1110 = vmatpush2.msra.mxu0 0.0
          %1111 = vmatprep.subr.mxu0 0.0
          %1112 = vmatpush2.msra.mxu0 0.0
          %1113 = vmatprep.subr.mxu0 0.0
          %1114 = vmatpush2.msra.mxu0 0.0
          %1115 = vmatprep.subr.mxu0 0.0
          %1116 = vmatpush2.msra.mxu0 0.0
          %1117 = vmatprep.subr.mxu0 0.0
          %1118 = vmatpush2.msra.mxu0 0.0
          %1119 = vmatprep.subr.mxu0 0.0
          %1120 = vmatpush2.msra.mxu0 0.0
          %1121 = vmatprep.subr.mxu0 0.0
          %1122 = vmatpush2.msra.mxu0 0.0
          %1123 = vmatprep.subr.mxu0 0.0
          %1124 = vmatpush2.msra.mxu0 0.0
          %1125 = vmatprep.subr.mxu0 0.0
          %1126 = vmatpush2.msra.mxu0 0.0
          %1127 = vmatprep.subr.mxu0 0.0
          %1128 = vmatpush2.msra.mxu0 0.0
          %1129 = vmatprep.subr.mxu0 0.0
          %1130 = vmatpush2.msra.mxu0 0.0
          %1131 = vmatprep.subr.mxu0 0.0
          %1132 = vmatpush2.msra.mxu0 0.0
          %1133 = vmatprep.subr.mxu0 0.0
          %1134 = vmatpush2.msra.mxu0 0.0
          %1135 = vmatprep.subr.mxu0 0.0
          %1136 = vmatpush2.msra.mxu0 0.0
          %1137 = vmatprep.subr.mxu0 0.0
          %1138 = vmatpush2.msra.mxu0 0.0
          %1139 = vmatprep.subr.mxu0 0.0
          %1140 = vmatpush2.msra.mxu0 0.0
          %1141 = vmatprep.mubr.f32.mxu0 0.0
          %1142 = vmatmul.mubr.f32.gmra.mxu0 %v1061
          %v1143 = vpop.f32.mrf.mxu0
          %v1144 = vadd.f32 0.0, %v1143
          %v1145 = vpop.f32.mrf.mxu0
          %1146 = vmatprep.mubr.f32.mxu0 0.0
          %1147 = vmatmul.mubr.f32.gmra.mxu0 %v1062
          %v1148 = vpop.f32.mrf.mxu0
          %v1149 = vadd.f32 0.0, %v1148
          %v1150 = vpop.f32.mrf.mxu0
          %1151 = vmatprep.mubr.f32.mxu0 0.0
          %1152 = vmatmul.mubr.f32.gmra.mxu0 %v1063
          %v1153 = vpop.f32.mrf.mxu0
          %v1154 = vadd.f32 0.0, %v1153
          %v1155 = vpop.f32.mrf.mxu0
          %1156 = vmatprep.mubr.f32.mxu0 0.0
          %1157 = vmatmul.mubr.f32.gmra.mxu0 %v1064
          %v1158 = vpop.f32.mrf.mxu0
          %v1159 = vadd.f32 0.0, %v1158
          %v1160 = vpop.f32.mrf.mxu0
          %1161 = vmatprep.mubr.f32.mxu0 0.0
          %1162 = vmatmul.mubr.f32.gmra.mxu0 %v1065
          %v1163 = vpop.f32.mrf.mxu0
          %v1164 = vadd.f32 0.0, %v1163
          %v1165 = vpop.f32.mrf.mxu0
          %1166 = vmatprep.mubr.f32.mxu0 0.0
          %1167 = vmatmul.mubr.f32.gmra.mxu0 %v1066
          %v1168 = vpop.f32.mrf.mxu0
          %v1169 = vadd.f32 0.0, %v1168
          %v1170 = vpop.f32.mrf.mxu0
          %1171 = vmatprep.mubr.f32.mxu0 0.0
          %1172 = vmatmul.mubr.f32.gmra.mxu0 %v1067
          %v1173 = vpop.f32.mrf.mxu0
          %v1174 = vadd.f32 0.0, %v1173
          %v1175 = vpop.f32.mrf.mxu0
          %1176 = vmatprep.mubr.f32.mxu0 0.0
          %1177 = vmatmul.mubr.f32.gmra.mxu0 %v1068
          %v1178 = vpop.f32.mrf.mxu0
          %v1179 = vadd.f32 0.0, %v1178
          %v1180 = vpop.f32.mrf.mxu0
          %1181 = vmatprep.mubr.f32.mxu0 0.0
          %1182 = vmatmul.mubr.f32.gmra.mxu0 %v1069
          %v1183 = vpop.f32.mrf.mxu0
          %v1184 = vadd.f32 0.0, %v1183
          %v1185 = vpop.f32.mrf.mxu0
          %1186 = vmatprep.mubr.f32.mxu0 0.0
          %1187 = vmatmul.mubr.f32.gmra.mxu0 %v1070
          %v1188 = vpop.f32.mrf.mxu0
          %v1189 = vadd.f32 0.0, %v1188
          %v1190 = vpop.f32.mrf.mxu0
          %1191 = vmatprep.mubr.f32.mxu0 0.0
          %1192 = vmatmul.mubr.f32.gmra.mxu0 %v1071
          %v1193 = vpop.f32.mrf.mxu0
          %v1194 = vadd.f32 0.0, %v1193
          %v1195 = vpop.f32.mrf.mxu0
          %1196 = vmatprep.mubr.f32.mxu0 0.0
          %1197 = vmatmul.mubr.f32.gmra.mxu0 %v1072
          %v1198 = vpop.f32.mrf.mxu0
          %v1199 = vadd.f32 0.0, %v1198
          %v1200 = vpop.f32.mrf.mxu0
          %1201 = vmatprep.mubr.f32.mxu0 0.0
          %1202 = vmatmul.mubr.f32.gmra.mxu0 %v1073
          %v1203 = vpop.f32.mrf.mxu0
          %v1204 = vadd.f32 0.0, %v1203
          %v1205 = vpop.f32.mrf.mxu0
          %1206 = vmatprep.mubr.f32.mxu0 0.0
          %1207 = vmatmul.mubr.f32.gmra.mxu0 %v1074
          %v1208 = vpop.f32.mrf.mxu0
          %v1209 = vadd.f32 0.0, %v1208
          %v1210 = vpop.f32.mrf.mxu0
          %1211 = vmatprep.mubr.f32.mxu0 0.0
          %1212 = vmatmul.mubr.f32.gmra.mxu0 %v1075
          %v1213 = vpop.f32.mrf.mxu0
          %v1214 = vadd.f32 0.0, %v1213
          %v1215 = vpop.f32.mrf.mxu0
          %1216 = vmatprep.mubr.f32.mxu0 0.0
          %1217 = vmatmul.mubr.f32.gmra.mxu0 %v1076
          %v1218 = vpop.f32.mrf.mxu0
          %v1219 = vadd.f32 0.0, %v1218
          %v1220 = vpop.f32.mrf.mxu0
          %1221 = vdwg.mxu0
          %vm1222 = vcmp.ge.s32.totalorder %v511, 32
          %vm1223 = vcmp.lt.s32.totalorder %v511, 72
          %vm1224 = vmand %vm1222, %vm1223
          %v1225 = vsel %vm1224, 1, 0
          %vm1226 = vcmp.eq.s32.totalorder %v1225, 1
          %v1227 = vsel %vm1226, %v1144, %v1044
          %v1228 = vsel %vm1226, %v1149, %v1045
          %v1229 = vsel %vm1226, %v1154, %v1046
          %v1230 = vsel %vm1226, %v1159, %v1047
          %v1231 = vsel %vm1226, %v1164, %v1048
          %v1232 = vsel %vm1226, %v1169, %v1049
          %v1233 = vsel %vm1226, %v1174, %v1050
          %v1234 = vsel %vm1226, %v1179, %v1051
          %v1235 = vsel %vm1226, %v1184, %v1052
          %v1236 = vsel %vm1226, %v1189, %v1053
          %v1237 = vsel %vm1226, %v1194, %v1054
          %v1238 = vsel %vm1226, %v1199, %v1055
          %v1239 = vsel %vm1226, %v1204, %v1056
          %v1240 = vsel %vm1226, %v1209, %v1057
          %v1241 = vsel %vm1226, %v1214, %v1058
          %v1242 = vsel %vm1226, %v1219, %v1059
          %1243 = vst.msk [vmem:[%s242] sm:$0xff] %vm473, %v1227
          %1244 = vst.msk [vmem:[%s242 + $0x8] sm:$0xff] %vm473, %v1228
          %1245 = vst.msk [vmem:[%s242 + $0x10] sm:$0xff] %vm473, %v1229
          %1246 = vst.msk [vmem:[%s242 + $0x18] sm:$0xff] %vm473, %v1230
          %1247 = vst.msk [vmem:[%s242 + $0x20] sm:$0xff] %vm473, %v1231
          %1248 = vst.msk [vmem:[%s242 + $0x28] sm:$0xff] %vm473, %v1232
          %1249 = vst.msk [vmem:[%s242 + $0x30] sm:$0xff] %vm473, %v1233
          %1250 = vst.msk [vmem:[%s242 + $0x38] sm:$0xff] %vm473, %v1234
          %1251 = vst.msk [vmem:[%s242 + $0x40] sm:$0xff] %vm473, %v1235
          %1252 = vst.msk [vmem:[%s242 + $0x48] sm:$0xff] %vm473, %v1236
          %1253 = vst.msk [vmem:[%s242 + $0x50] sm:$0xff] %vm473, %v1237
          %1254 = vst.msk [vmem:[%s242 + $0x58] sm:$0xff] %vm473, %v1238
          %1255 = vst.msk [vmem:[%s242 + $0x60] sm:$0xff] %vm473, %v1239
          %1256 = vst.msk [vmem:[%s242 + $0x68] sm:$0xff] %vm473, %v1240
          %1257 = vst.msk [vmem:[%s242 + $0x70] sm:$0xff] %vm473, %v1241
          %1258 = vst.msk [vmem:[%s242 + $0x78] sm:$0xff] %vm473, %v1242
        $region48: #{tpu_custom_call.1} parent=31 // pred_fallthru
          _
        %p1259 = scmp.lt.s32.totalorder %s22, 1
        %s1260 = scalar_select %p1259, %s22, 1
        %s1261 = smul.addr %s1260, 16
        %s1262 = smul.addr %s1261, 8
        %s1263 = scalar_lea.vmem %s3, %s1262
        // Predicated region
        $region49: #{tpu_custom_call.1} parent=31 // pred_check
          %p1264 = pneg %p123
        $region50: #{tpu_custom_call.1} parent=31 // pred_check_branch
          %1266 = sbr.rel (%p1264) target = $region52
        $region51: #{tpu_custom_call.1} parent=31 // pred_region
          _
        $region52: #{tpu_custom_call.1} parent=31 // pred_fallthru
          _
      $region32: #{tpu_custom_call.1} parent=5 // pred_fallthru
        _
      %p1267 = scmp.le.s32.totalorder 2, %s13
      // Predicated region
      $region53: #{tpu_custom_call.1} parent=5 // pred_check
        %p1268 = pneg %p1267
      $region54: #{tpu_custom_call.1} parent=5 // pred_check_branch
        %1270 = sbr.rel (%p1268) target = $region56
      $region55: #{tpu_custom_call.1} parent=5 // pred_region
        %s1271 = ssub.s32 %s13, 2
        // Predicated region
        $region57: #{tpu_custom_call.1} parent=55 // pred_check
          %p1272 = pneg %p129
        $region58: #{tpu_custom_call.1} parent=55 // pred_check_branch
          %1274 = sbr.rel (%p1272) target = $region60
        $region59: #{tpu_custom_call.1} parent=55 // pred_region
          %p1275 = scmp.lt.s32.totalorder %s24, 1
          %s1276 = scalar_select %p1275, %s24, 1
          %s1277 = smul.addr %s1276, 16
          %s1278 = smul.addr %s1277, 8
          %s1279 = scalar_lea.vmem %s3, %s1278
        $region60: #{tpu_custom_call.1} parent=55 // pred_fallthru
          _
      $region56: #{tpu_custom_call.1} parent=5 // pred_fallthru
        _
    $region6: #{tpu_custom_call.1} parent=1 // loop_footer
      %s17 = sadd.s32 1, %s13
    $region7: #{tpu_custom_call.1} parent=1 // loop_footer_branch
      %12 = sbr.rel target = $region3
    $region8: #{tpu_custom_call.1} parent=1 // loop_exit
      _
    %1280 = vsyncpa [#allocation4], 1
    %s1281 = scalar_lea.sflag [#allocation4], 1
    %1282 = vsyncpa %s1281, 1
    %1283 = vsyncpa [#allocation6], 1

</llo_original>
